<compile_context>
chip_gen: v6e
topology: v6e:2x2x1
jax: 0.10.0
libtpu: 0.0.40
codegen_flags: <defaults>
</compile_context>

<pallas_src>
import math

import jax
import jax.numpy as jnp
from jax import lax
from jax.experimental import pallas as pl
from jax.experimental.pallas import tpu as pltpu


def _mlp_kernel_transposed(x_ref, w1t_ref, b1_ref, w2t_ref, b2_ref,
                           w3t_ref, b3_ref, o_ref):
    """Lane-dense (transposed) formulation: batch lives on lanes throughout."""
    x = x_ref[...]            # (tile_b, x_dim)   f32 or bf16
    w1t = w1t_ref[...]        # (h1s, x_dim)      same dtype as x

    # h1^T = relu(W1 @ x^T + b1): NT matmul — contract the feature dim of both
    # operands (the q @ k^T pattern), result is (h1s, tile_b) with batch on lanes.
    h1t = lax.dot_general(w1t, x, (((1,), (1,)), ((), ())),
                          preferred_element_type=jnp.float32)
    h1t = jnp.maximum(h1t + b1_ref[...], 0.0)          # (h1s, tile_b) f32

    # h2^T = relu(W2 @ h1^T + b2)   — tiny dense slab, (h2s, tile_b)
    h2t = jnp.dot(w2t_ref[...], h1t, preferred_element_type=jnp.float32)
    h2t = jnp.maximum(h2t + b2_ref[...], 0.0)

    # o^T = relu(W3 @ h2^T + b3)    — W3 is padded to 8 rows; row 0 is the output
    o_t = jnp.dot(w3t_ref[...], h2t, preferred_element_type=jnp.float32)
    o_t = jnp.maximum(o_t + b3_ref[...], 0.0)           # (8, tile_b)

    o_ref[...] = o_t[0:1, :].astype(o_ref.dtype)         # lane-dense (1, tile_b)


def _mlp_kernel_natural(x_ref, w1_ref, b1_ref, w2_ref, b2_ref,
                        w3_ref, b3_ref, o_ref):
    """Fallback: natural orientation (y = x @ W + b), previously validated."""
    h1 = jnp.dot(x_ref[...], w1_ref[...], preferred_element_type=jnp.float32)
    h1 = jnp.maximum(h1 + b1_ref[...], 0.0)
    h2 = jnp.dot(h1, w2_ref[...], preferred_element_type=jnp.float32)
    h2 = jnp.maximum(h2 + b2_ref[...], 0.0)
    h3 = jnp.dot(h2, w3_ref[...], preferred_element_type=jnp.float32)
    o_ref[...] = jnp.maximum(h3 + b3_ref[...], 0.0).astype(o_ref.dtype)


def _round_up(n, m):
    return ((n + m - 1) // m) * m


def my_neural_net_forward(x, params, *, tile_b=4096):
    """3-layer MLP forward pass as a batch-tiled Pallas TPU kernel.

    x      : (batch, x_dim), f32 or bf16 (bf16 halves the HBM stream of X).
    params : (w1, b1, w2, b2, w3, b3) in PyTorch orientation: w (out, in), b (out,).
    tile_b : rows of X per grid step (rounded to a multiple of 128).
    """
    w1, b1, w2, b2, w3, b3 = params
    batch, x_dim = x.shape
    h1_dim, h2_dim = w1.shape[0], w2.shape[0]
    f32 = jnp.float32

    # ---- batch tiling: no full-batch HBM pad --------------------------------
    # Large batches are never padded (that would re-read+write the only large
    # operand); the cdiv grid handles a ragged final block.  Only a sub-128-row
    # batch gets a trivial pad up to one 128-row tile.
    if batch < 128:
        x = jnp.pad(x, ((0, 128 - batch), (0, 0)))
    rows = x.shape[0]
    tile_b = max(128, min((int(tile_b) // 128) * 128, (rows // 128) * 128))
    num_tiles = pl.cdiv(rows, tile_b)
    out_cols = num_tiles * tile_b

    flops = 2 * rows * (x_dim * h1_dim + h1_dim * h2_dim + h2_dim)
    bytes_accessed = (rows * x_dim * x.dtype.itemsize
                      + sum(int(p.size) * 4 for p in params)
                      + rows * 4)
    cparams = pltpu.CompilerParams(
        dimension_semantics=("parallel",),          # batch tiles are independent
        vmem_limit_bytes=32 * 1024 * 1024,          # covers v5e's 16 MiB default
    )
    cost = pl.CostEstimate(flops=flops, transcendentals=0,
                           bytes_accessed=bytes_accessed)

    # ---- fast path: transposed, lane-dense kernel ---------------------------
    # Hidden dims are zero-padded to sublane multiples; padded rows stay exactly
    # zero through relu, so results are bit-identical to the unpadded math.
    h1s = _round_up(h1_dim, 8)
    h2s = _round_up(h2_dim, 8)
    w1t = jnp.zeros((h1s, x_dim), f32).at[:h1_dim].set(w1.astype(f32)).astype(x.dtype)
    b1c = jnp.zeros((h1s, 1), f32).at[:h1_dim, 0].set(b1.astype(f32))
    w2t = jnp.zeros((h2s, h1s), f32).at[:h2_dim, :h1_dim].set(w2.astype(f32))
    b2c = jnp.zeros((h2s, 1), f32).at[:h2_dim, 0].set(b2.astype(f32))
    w3t = jnp.zeros((8, h2s), f32).at[0, :h2_dim].set(w3[0].astype(f32))
    b3c = jnp.zeros((8, 1), f32).at[0, 0].set(b3.astype(f32)[0])

    try:
        out_row = pl.pallas_call(
            _mlp_kernel_transposed,
            out_shape=jax.ShapeDtypeStruct((1, out_cols), f32),
            grid=(num_tiles,),
            in_specs=[
                # X: one (tile_b, x_dim) tile per step — double-buffered DMA.
                pl.BlockSpec((tile_b, x_dim), lambda i: (i, 0)),
                # Weights/biases: full-shape, constant index -> VMEM-resident.
                pl.BlockSpec((h1s, x_dim), lambda i: (0, 0)),
                pl.BlockSpec((h1s, 1), lambda i: (0, 0)),
                pl.BlockSpec((h2s, h1s), lambda i: (0, 0)),
                pl.BlockSpec((h2s, 1), lambda i: (0, 0)),
                pl.BlockSpec((8, h2s), lambda i: (0, 0)),
                pl.BlockSpec((8, 1), lambda i: (0, 0)),
            ],
            # Lane-dense output row: 128-lane stores instead of 1-lane vst.msk.
            out_specs=pl.BlockSpec((1, tile_b), lambda i: (0, i)),
            compiler_params=cparams,
            cost_estimate=cost,
        )(x, w1t, b1c, w2t, b2c, w3t, b3c)
        return out_row[0, :batch, None]
    except Exception:
        # Transposed formulation failed to lower on this backend/shape;
        # fall back to the natural-orientation kernel below.
        pass

    # ---- fallback: natural orientation (y = x @ W + b) ----------------------
    w1n = w1.T.astype(x.dtype)
    b1n = b1[None, :].astype(f32)
    w2n = w2.T.astype(f32)
    b2n = b2[None, :].astype(f32)
    w3n = w3.T.astype(f32)
    b3n = b3[None, :].astype(f32)
    out_col = pl.pallas_call(
        _mlp_kernel_natural,
        out_shape=jax.ShapeDtypeStruct((out_cols, 1), f32),
        grid=(num_tiles,),
        in_specs=[
            pl.BlockSpec((tile_b, x_dim), lambda i: (i, 0)),
            pl.BlockSpec((x_dim, h1_dim), lambda i: (0, 0)),
            pl.BlockSpec((1, h1_dim), lambda i: (0, 0)),
            pl.BlockSpec((h1_dim, h2_dim), lambda i: (0, 0)),
            pl.BlockSpec((1, h2_dim), lambda i: (0, 0)),
            pl.BlockSpec((h2_dim, 1), lambda i: (0, 0)),
            pl.BlockSpec((1, 1), lambda i: (0, 0)),
        ],
        out_specs=pl.BlockSpec((tile_b, 1), lambda i: (i, 0)),
        compiler_params=cparams,
        cost_estimate=cost,
    )(x, w1n, b1n, w2n, b2n, w3n, b3n)
    return out_col[:batch]


def init_params(key, x_dim):
    """nn.Linear-style init, PyTorch orientation: w (out, in), b (out,)."""
    h1 = int(math.sqrt(x_dim))   # int(np.sqrt(X_dim))
    h2 = int(math.log(x_dim))    # int(np.log(X_dim))
    dims = [(h1, x_dim), (h2, h1), (1, h2)]
    keys = jax.random.split(key, 2 * len(dims))
    params = []
    for i, (fan_out, fan_in) in enumerate(dims):
        bound = 1.0 / math.sqrt(fan_in)
        w = jax.random.uniform(keys[2 * i], (fan_out, fan_in),
                               minval=-bound, maxval=bound, dtype=jnp.float32)
        b = jax.random.uniform(keys[2 * i + 1], (fan_out,),
                               minval=-bound, maxval=bound, dtype=jnp.float32)
        params += [w, b]
    return tuple(params)


def reference_forward(x, params):
    """Pure-JAX reference (identical math to the PyTorch module)."""
    w1, b1, w2, b2, w3, b3 = params
    h = jnp.maximum(x.astype(jnp.float32) @ w1.T + b1, 0.0)
    h = jnp.maximum(h @ w2.T + b2, 0.0)
    h = jnp.maximum(h @ w3.T + b3, 0.0)
    return h


if __name__ == "__main__":
    key = jax.random.PRNGKey(0)
    k_p, k_x1, k_x2 = jax.random.split(key, 3)

    x_dim = 64                    # hidden dims: sqrt(64)=8, int(log(64))=4, out=1
    params = init_params(k_p, x_dim)

    # Batch not a multiple of the tile: exercises the ragged final block
    # (no HBM-side padding of X).
    batch = 300
    x = jax.random.normal(k_x1, (batch, x_dim), dtype=jnp.float32)
    out = jax.block_until_ready(my_neural_net_forward(x, params, tile_b=256))
    ref = reference_forward(x, params)
    assert out.shape == (batch, 1)
    assert jnp.allclose(out, ref, atol=1e-5, rtol=1e-5)

    # Tiny batch (< one 128-row tile) — trivial pad path.
    x_small = jax.random.normal(k_x2, (8, x_dim), dtype=jnp.float32)
    out_small = jax.block_until_ready(my_neural_net_forward(x_small, params))
    ref_small = reference_forward(x_small, params)
    assert out_small.shape == (8, 1)
    assert jnp.allclose(out_small, ref_small, atol=1e-5, rtol=1e-5)

    # bf16 X fast path: X and W1 go through the MXU in bf16 (f32 accumulation),
    # halving the HBM stream of the only large operand.
    out_bf16 = jax.block_until_ready(
        my_neural_net_forward(x.astype(jnp.bfloat16), params, tile_b=256))
    assert jnp.allclose(out_bf16, ref, atol=5e-2, rtol=5e-2)

    # TODO(synk): training path (Adam/MSE/fit) and the unused sigmoid are not
    # part of the forward pass and are not implemented as kernels.
    print("KERNEL_OK")
</pallas_src>

<mosaic_0001>
module attributes {stable_mosaic.version = 11 : i64} {
  func.func @_mlp_kernel_transposed(%arg0: i32, %arg1: memref<256x64xf32, #tpu.memory_space<vmem>>, %arg2: memref<8x64xf32, #tpu.memory_space<vmem>>, %arg3: memref<8x1xf32, #tpu.memory_space<vmem>>, %arg4: memref<8x8xf32, #tpu.memory_space<vmem>>, %arg5: memref<8x1xf32, #tpu.memory_space<vmem>>, %arg6: memref<8x8xf32, #tpu.memory_space<vmem>>, %arg7: memref<8x1xf32, #tpu.memory_space<vmem>>, %arg8: memref<1x256xf32, #tpu.memory_space<vmem>>) attributes {dimension_semantics = [#tpu.dimension_semantics<parallel>], iteration_bounds = array<i64: 2>, scalar_prefetch = 0 : i64, scratch_operands = 0 : i64, tpu.core_type = #tpu.core_type<tc>, window_params = [{transform_indices = @transform_0, window_bounds = array<i64: 256, 64>}, {pipeline_mode = #tpu.pipeline_mode<synchronous>, transform_indices = @transform_1, window_bounds = array<i64: 8, 64>}, {pipeline_mode = #tpu.pipeline_mode<synchronous>, transform_indices = @transform_2, window_bounds = array<i64: 8, 1>}, {pipeline_mode = #tpu.pipeline_mode<synchronous>, transform_indices = @transform_3, window_bounds = array<i64: 8, 8>}, {pipeline_mode = #tpu.pipeline_mode<synchronous>, transform_indices = @transform_4, window_bounds = array<i64: 8, 1>}, {pipeline_mode = #tpu.pipeline_mode<synchronous>, transform_indices = @transform_5, window_bounds = array<i64: 8, 8>}, {pipeline_mode = #tpu.pipeline_mode<synchronous>, transform_indices = @transform_6, window_bounds = array<i64: 8, 1>}, {transform_indices = @transform_7, window_bounds = array<i64: 1, 256>}]} {
    %c0 = arith.constant 0 : index
    %c0_0 = arith.constant 0 : index
    %0 = vector.load %arg1[%c0, %c0_0] : memref<256x64xf32, #tpu.memory_space<vmem>>, vector<256x64xf32>
    %c0_1 = arith.constant 0 : index
    %c0_2 = arith.constant 0 : index
    %1 = vector.load %arg2[%c0_1, %c0_2] : memref<8x64xf32, #tpu.memory_space<vmem>>, vector<8x64xf32>
    %cst = arith.constant dense<0.000000e+00> : vector<8x256xf32>
    %2 = tpu.matmul %1, %0, %cst {dimension_numbers = #tpu.dot_dimension_numbers<[1], [1], [0], [0], [0, 0, 1, 0], [], []>} : vector<8x64xf32>, vector<256x64xf32>, vector<8x256xf32> -> vector<8x256xf32>
    %c0_3 = arith.constant 0 : index
    %c0_4 = arith.constant 0 : index
    %3 = vector.load %arg3[%c0_3, %c0_4] : memref<8x1xf32, #tpu.memory_space<vmem>>, vector<8x1xf32>
    %4 = vector.broadcast %3 : vector<8x1xf32> to vector<8x256xf32>
    %5 = arith.addf %2, %4 : vector<8x256xf32>
    %cst_5 = arith.constant 0.000000e+00 : f32
    %6 = vector.broadcast %cst_5 : f32 to vector<8x256xf32>
    %7 = arith.maximumf %5, %6 : vector<8x256xf32>
    %c0_6 = arith.constant 0 : index
    %c0_7 = arith.constant 0 : index
    %8 = vector.load %arg4[%c0_6, %c0_7] : memref<8x8xf32, #tpu.memory_space<vmem>>, vector<8x8xf32>
    %cst_8 = arith.constant dense<0.000000e+00> : vector<8x256xf32>
    %9 = tpu.matmul %8, %7, %cst_8 {dimension_numbers = #tpu.dot_dimension_numbers<[1], [0], [0], [1], [0, 0, 1, 1], [], []>} : vector<8x8xf32>, vector<8x256xf32>, vector<8x256xf32> -> vector<8x256xf32>
    %c0_9 = arith.constant 0 : index
    %c0_10 = arith.constant 0 : index
    %10 = vector.load %arg5[%c0_9, %c0_10] : memref<8x1xf32, #tpu.memory_space<vmem>>, vector<8x1xf32>
    %11 = vector.broadcast %10 : vector<8x1xf32> to vector<8x256xf32>
    %12 = arith.addf %9, %11 : vector<8x256xf32>
    %cst_11 = arith.constant 0.000000e+00 : f32
    %13 = vector.broadcast %cst_11 : f32 to vector<8x256xf32>
    %14 = arith.maximumf %12, %13 : vector<8x256xf32>
    %c0_12 = arith.constant 0 : index
    %c0_13 = arith.constant 0 : index
    %15 = vector.load %arg6[%c0_12, %c0_13] : memref<8x8xf32, #tpu.memory_space<vmem>>, vector<8x8xf32>
    %cst_14 = arith.constant dense<0.000000e+00> : vector<8x256xf32>
    %16 = tpu.matmul %15, %14, %cst_14 {dimension_numbers = #tpu.dot_dimension_numbers<[1], [0], [0], [1], [0, 0, 1, 1], [], []>} : vector<8x8xf32>, vector<8x256xf32>, vector<8x256xf32> -> vector<8x256xf32>
    %c0_15 = arith.constant 0 : index
    %c0_16 = arith.constant 0 : index
    %17 = vector.load %arg7[%c0_15, %c0_16] : memref<8x1xf32, #tpu.memory_space<vmem>>, vector<8x1xf32>
    %18 = vector.broadcast %17 : vector<8x1xf32> to vector<8x256xf32>
    %19 = arith.addf %16, %18 : vector<8x256xf32>
    %cst_17 = arith.constant 0.000000e+00 : f32
    %20 = vector.broadcast %cst_17 : f32 to vector<8x256xf32>
    %21 = arith.maximumf %19, %20 : vector<8x256xf32>
    %22 = vector.extract_strided_slice %21 {offsets = [0, 0], sizes = [1, 256], strides = [1, 1]} : vector<8x256xf32> to vector<1x256xf32>
    %c0_18 = arith.constant 0 : index
    %c0_19 = arith.constant 0 : index
    %23 = vector.load %arg8[%c0_18, %c0_19] : memref<1x256xf32, #tpu.memory_space<vmem>>, vector<1x256xf32>
    tpu.vector_store %arg8[%c0_18, %c0_19], %22 {strides = array<i32>} : memref<1x256xf32, #tpu.memory_space<vmem>>, vector<1x256xf32>,
    return
  }
  func.func @transform_0(%arg0: i32) -> (i32, i32) {
    %c0_i32 = arith.constant 0 : i32
    %c0_i32_0 = arith.constant 0 : i32
    return %arg0, %c0_i32 : i32, i32
  }
  func.func @transform_1(%arg0: i32) -> (i32, i32) {
    %c0_i32 = arith.constant 0 : i32
    %c0_i32_0 = arith.constant 0 : i32
    %c0_i32_1 = arith.constant 0 : i32
    return %c0_i32, %c0_i32_0 : i32, i32
  }
  func.func @transform_2(%arg0: i32) -> (i32, i32) {
    %c0_i32 = arith.constant 0 : i32
    %c0_i32_0 = arith.constant 0 : i32
    %c0_i32_1 = arith.constant 0 : i32
    return %c0_i32, %c0_i32_0 : i32, i32
  }
  func.func @transform_3(%arg0: i32) -> (i32, i32) {
    %c0_i32 = arith.constant 0 : i32
    %c0_i32_0 = arith.constant 0 : i32
    %c0_i32_1 = arith.constant 0 : i32
    return %c0_i32, %c0_i32_0 : i32, i32
  }
  func.func @transform_4(%arg0: i32) -> (i32, i32) {
    %c0_i32 = arith.constant 0 : i32
    %c0_i32_0 = arith.constant 0 : i32
    %c0_i32_1 = arith.constant 0 : i32
    return %c0_i32, %c0_i32_0 : i32, i32
  }
  func.func @transform_5(%arg0: i32) -> (i32, i32) {
    %c0_i32 = arith.constant 0 : i32
    %c0_i32_0 = arith.constant 0 : i32
    %c0_i32_1 = arith.constant 0 : i32
    return %c0_i32, %c0_i32_0 : i32, i32
  }
  func.func @transform_6(%arg0: i32) -> (i32, i32) {
    %c0_i32 = arith.constant 0 : i32
    %c0_i32_0 = arith.constant 0 : i32
    %c0_i32_1 = arith.constant 0 : i32
    return %c0_i32, %c0_i32_0 : i32, i32
  }
  func.func @transform_7(%arg0: i32) -> (i32, i32) {
    %c0_i32 = arith.constant 0 : i32
    %c0_i32_0 = arith.constant 0 : i32
    return %c0_i32, %arg0 : i32, i32
  }
}

module attributes {stable_mosaic.version = 11 : i64} {
  func.func @_mlp_kernel_natural(%arg0: i32, %arg1: memref<256x64xf32, #tpu.memory_space<vmem>>, %arg2: memref<64x8xf32, #tpu.memory_space<vmem>>, %arg3: memref<1x8xf32, #tpu.memory_space<vmem>>, %arg4: memref<8x4xf32, #tpu.memory_space<vmem>>, %arg5: memref<1x4xf32, #tpu.memory_space<vmem>>, %arg6: memref<4x1xf32, #tpu.memory_space<vmem>>, %arg7: memref<1x1xf32, #tpu.memory_space<vmem>>, %arg8: memref<256x1xf32, #tpu.memory_space<vmem>>) attributes {dimension_semantics = [#tpu.dimension_semantics<parallel>], iteration_bounds = array<i64: 2>, scalar_prefetch = 0 : i64, scratch_operands = 0 : i64, tpu.core_type = #tpu.core_type<tc>, window_params = [{transform_indices = @transform_0, window_bounds = array<i64: 256, 64>}, {pipeline_mode = #tpu.pipeline_mode<synchronous>, transform_indices = @transform_1, window_bounds = array<i64: 64, 8>}, {pipeline_mode = #tpu.pipeline_mode<synchronous>, transform_indices = @transform_2, window_bounds = array<i64: 1, 8>}, {pipeline_mode = #tpu.pipeline_mode<synchronous>, transform_indices = @transform_3, window_bounds = array<i64: 8, 4>}, {pipeline_mode = #tpu.pipeline_mode<synchronous>, transform_indices = @transform_4, window_bounds = array<i64: 1, 4>}, {pipeline_mode = #tpu.pipeline_mode<synchronous>, transform_indices = @transform_5, window_bounds = array<i64: 4, 1>}, {pipeline_mode = #tpu.pipeline_mode<synchronous>, transform_indices = @transform_6, window_bounds = array<i64: 1, 1>}, {transform_indices = @transform_7, window_bounds = array<i64: 256, 1>}]} {
    %c0 = arith.constant 0 : index
    %c0_0 = arith.constant 0 : index
    %0 = vector.load %arg1[%c0, %c0_0] : memref<256x64xf32, #tpu.memory_space<vmem>>, vector<256x64xf32>
    %c0_1 = arith.constant 0 : index
    %c0_2 = arith.constant 0 : index
    %1 = vector.load %arg2[%c0_1, %c0_2] : memref<64x8xf32, #tpu.memory_space<vmem>>, vector<64x8xf32>
    %cst = arith.constant dense<0.000000e+00> : vector<256x8xf32>
    %2 = tpu.matmul %0, %1, %cst {dimension_numbers = #tpu.dot_dimension_numbers<[1], [0], [0], [1], [0, 0, 1, 1], [], []>} : vector<256x64xf32>, vector<64x8xf32>, vector<256x8xf32> -> vector<256x8xf32>
    %c0_3 = arith.constant 0 : index
    %c0_4 = arith.constant 0 : index
    %3 = vector.load %arg3[%c0_3, %c0_4] : memref<1x8xf32, #tpu.memory_space<vmem>>, vector<1x8xf32>
    %4 = vector.broadcast %3 : vector<1x8xf32> to vector<256x8xf32>
    %5 = arith.addf %2, %4 : vector<256x8xf32>
    %cst_5 = arith.constant 0.000000e+00 : f32
    %6 = vector.broadcast %cst_5 : f32 to vector<256x8xf32>
    %7 = arith.maximumf %5, %6 : vector<256x8xf32>
    %c0_6 = arith.constant 0 : index
    %c0_7 = arith.constant 0 : index
    %8 = vector.load %arg4[%c0_6, %c0_7] : memref<8x4xf32, #tpu.memory_space<vmem>>, vector<8x4xf32>
    %cst_8 = arith.constant dense<0.000000e+00> : vector<256x4xf32>
    %9 = tpu.matmul %7, %8, %cst_8 {dimension_numbers = #tpu.dot_dimension_numbers<[1], [0], [0], [1], [0, 0, 1, 1], [], []>} : vector<256x8xf32>, vector<8x4xf32>, vector<256x4xf32> -> vector<256x4xf32>
    %c0_9 = arith.constant 0 : index
    %c0_10 = arith.constant 0 : index
    %10 = vector.load %arg5[%c0_9, %c0_10] : memref<1x4xf32, #tpu.memory_space<vmem>>, vector<1x4xf32>
    %11 = vector.broadcast %10 : vector<1x4xf32> to vector<256x4xf32>
    %12 = arith.addf %9, %11 : vector<256x4xf32>
    %cst_11 = arith.constant 0.000000e+00 : f32
    %13 = vector.broadcast %cst_11 : f32 to vector<256x4xf32>
    %14 = arith.maximumf %12, %13 : vector<256x4xf32>
    %c0_12 = arith.constant 0 : index
    %c0_13 = arith.constant 0 : index
    %15 = vector.load %arg6[%c0_12, %c0_13] : memref<4x1xf32, #tpu.memory_space<vmem>>, vector<4x1xf32>
    %cst_14 = arith.constant dense<0.000000e+00> : vector<256x1xf32>
    %16 = tpu.matmul %14, %15, %cst_14 {dimension_numbers = #tpu.dot_dimension_numbers<[1], [0], [0], [1], [0, 0, 1, 1], [], []>} : vector<256x4xf32>, vector<4x1xf32>, vector<256x1xf32> -> vector<256x1xf32>
    %c0_15 = arith.constant 0 : index
    %c0_16 = arith.constant 0 : index
    %17 = vector.load %arg7[%c0_15, %c0_16] : memref<1x1xf32, #tpu.memory_space<vmem>>, vector<1x1xf32>
    %18 = vector.broadcast %17 : vector<1x1xf32> to vector<256x1xf32>
    %19 = arith.addf %16, %18 : vector<256x1xf32>
    %cst_17 = arith.constant 0.000000e+00 : f32
    %20 = vector.broadcast %cst_17 : f32 to vector<256x1xf32>
    %21 = arith.maximumf %19, %20 : vector<256x1xf32>
    %c0_18 = arith.constant 0 : index
    %c0_19 = arith.constant 0 : index
    %22 = vector.load %arg8[%c0_18, %c0_19] : memref<256x1xf32, #tpu.memory_space<vmem>>, vector<256x1xf32>
    tpu.vector_store %arg8[%c0_18, %c0_19], %21 {strides = array<i32>} : memref<256x1xf32, #tpu.memory_space<vmem>>, vector<256x1xf32>,
    return
  }
  func.func @transform_0(%arg0: i32) -> (i32, i32) {
    %c0_i32 = arith.constant 0 : i32
    %c0_i32_0 = arith.constant 0 : i32
    return %arg0, %c0_i32 : i32, i32
  }
  func.func @transform_1(%arg0: i32) -> (i32, i32) {
    %c0_i32 = arith.constant 0 : i32
    %c0_i32_0 = arith.constant 0 : i32
    %c0_i32_1 = arith.constant 0 : i32
    return %c0_i32, %c0_i32_0 : i32, i32
  }
  func.func @transform_2(%arg0: i32) -> (i32, i32) {
    %c0_i32 = arith.constant 0 : i32
    %c0_i32_0 = arith.constant 0 : i32
    %c0_i32_1 = arith.constant 0 : i32
    return %c0_i32, %c0_i32_0 : i32, i32
  }
  func.func @transform_3(%arg0: i32) -> (i32, i32) {
    %c0_i32 = arith.constant 0 : i32
    %c0_i32_0 = arith.constant 0 : i32
    %c0_i32_1 = arith.constant 0 : i32
    return %c0_i32, %c0_i32_0 : i32, i32
  }
  func.func @transform_4(%arg0: i32) -> (i32, i32) {
    %c0_i32 = arith.constant 0 : i32
    %c0_i32_0 = arith.constant 0 : i32
    %c0_i32_1 = arith.constant 0 : i32
    return %c0_i32, %c0_i32_0 : i32, i32
  }
  func.func @transform_5(%arg0: i32) -> (i32, i32) {
    %c0_i32 = arith.constant 0 : i32
    %c0_i32_0 = arith.constant 0 : i32
    %c0_i32_1 = arith.constant 0 : i32
    return %c0_i32, %c0_i32_0 : i32, i32
  }
  func.func @transform_6(%arg0: i32) -> (i32, i32) {
    %c0_i32 = arith.constant 0 : i32
    %c0_i32_0 = arith.constant 0 : i32
    %c0_i32_1 = arith.constant 0 : i32
    return %c0_i32, %c0_i32_0 : i32, i32
  }
  func.func @transform_7(%arg0: i32) -> (i32, i32) {
    %c0_i32 = arith.constant 0 : i32
    %c0_i32_0 = arith.constant 0 : i32
    return %arg0, %c0_i32 : i32, i32
  }
}

</mosaic_0001>

<llo_original>
// kernel: tpu_custom_call.1
$region0: #{tpu_custom_call.1}
  #allocation0 [shape = 'u32[]', space=smem, size = 0x4, offset = 0x4, fixed_abs, tag = 'smem constant byte address 0x4 - core index']
  #allocation1 [shape = 'u32[144,128]{1,0:T(1,128)}', space=vmem, size = 0x12000, scoped, tag = 'internal scratch']
  %s0 = inlined_call_operand.vmem [shape: f32[300,64], index: 0, kind: input, shape index: {}]
  %s1 = inlined_call_operand.vmem [shape: f32[8,64], index: 1, kind: input, shape index: {}]
  %s2 = inlined_call_operand.vmem [shape: f32[8,1], index: 2, kind: input, shape index: {}]
  %s3 = inlined_call_operand.vmem [shape: f32[8,8], index: 3, kind: input, shape index: {}]
  %s4 = inlined_call_operand.vmem [shape: f32[8,1], index: 4, kind: input, shape index: {}]
  %s5 = inlined_call_operand.vmem [shape: f32[8,8], index: 5, kind: input, shape index: {}]
  %s6 = inlined_call_operand.vmem [shape: f32[8,1], index: 6, kind: input, shape index: {}]
  %s7 = inlined_call_operand.hbm [shape: f32[1,512], index: 7, kind: output, shape index: {}]
  %s8 = sld [smem:[#allocation0]]
  $region61: #{tpu_custom_call.1} parent=0
    _
  %s10 = ssub.s32 1, %s8
  %s11 = scalar_select 0, %s10, %s8
  $region1: #{tpu_custom_call.1} parent=0
    #allocation2 [shape = 'u8[2048]{0}', space=vmem, size = 0x800, scoped, tag = 'output window, operand 0']
    #allocation3 [shape = 's32[2]{0}', space=sflag, size = 0x8, scoped, tag = 'scoped memory for tpu_custom_call.1']
    %12 = vsyncpa [#allocation3], 0
    %s13 = scalar_lea.sflag [#allocation3], 1
    %14 = vsyncpa %s13, 0
    loop: start=0, step=1, limit=4
    $region2: #{tpu_custom_call.1} parent=1 // loop_pre_header
      _
    $region3: #{tpu_custom_call.1} parent=1 // loop_header
      %s16 = sphi 0, %s20
      %p17 = scmp.ge.s32.totalorder %s16, 4
      %s26 = sphi 0, %s28
      %s29 = sphi 0, %s26
      %s30 = sphi 0, %s29
      %s46 = sphi 0, %s30
      %s50 = sphi 0, %s50
      %s52 = sphi 0, %s50
      %s53 = sphi 0, %s52
      %s67 = sphi 0, %s53
      %s71 = sphi 0, %s71
      %s73 = sphi 0, %s71
      %s74 = sphi 0, %s73
      %s88 = sphi 0, %s74
      %s92 = sphi 0, %s92
      %s94 = sphi 0, %s92
      %s95 = sphi 0, %s94
      %s109 = sphi 0, %s95
      %s113 = sphi 0, %s113
      %s115 = sphi 0, %s113
      %s116 = sphi 0, %s115
      %s130 = sphi 0, %s116
      %s134 = sphi 0, %s134
      %s136 = sphi 0, %s134
      %s137 = sphi 0, %s136
      %s151 = sphi 0, %s137
      %s155 = sphi 0, %s155
      %s157 = sphi 0, %s155
      %s158 = sphi 0, %s157
      %s172 = sphi 0, %s158
      %s178 = sphi 0, %s180
      %s181 = sphi 0, %s178
      %s182 = sphi 0, %s181
      %s198 = sphi 0, %s182
    $region4: #{tpu_custom_call.1} parent=1 // loop_header_branch
      %19 = sbr.rel (%p17) target = $region8
    $region5: #{tpu_custom_call.1} parent=1 // loop_body
      %s21 = ssub.s32 %s16, 1
      %s22 = ssub.s32 %s16, 2
      %s23 = sadd.s32 %s16, 1
      %s24 = ssub.s32 %s16, %s23
      %p25 = scmp.eq.s32.totalorder %s24, 0
      %s27 = sadd.s32 %s26, 1
      %s28 = scalar_select %p25, %s26, %s27
      %p31 = pneg %p25
      %p32 = scmp.eq.s32.totalorder %s16, 1
      %p33 = por %p31, %p32
      %p34 = scmp.ne.s32.totalorder %s26, %s29
      %p35 = scmp.eq.s32.totalorder %s16, 0
      %p36 = por %p34, %p35
      %p37 = scmp.ne.s32.totalorder %s26, %s29
      %p38 = scmp.eq.s32.totalorder %s21, 1
      %p39 = por %p37, %p38
      %p40 = scmp.ne.s32.totalorder %s29, %s30
      %p41 = scmp.eq.s32.totalorder %s21, 0
      %p42 = por %p40, %p41
      %p43 = scmp.ne.s32.totalorder %s29, %s30
      %p44 = scmp.eq.s32.totalorder %s22, 1
      %p45 = por %p43, %p44
      %p47 = scmp.ne.s32.totalorder %s30, %s46
      %p48 = scmp.eq.s32.totalorder %s22, 0
      %p49 = por %p47, %p48
      %s51 = sadd.s32 %s50, 1
      %p54 = scmp.eq.s32.totalorder %s16, 1
      %p55 = scmp.ne.s32.totalorder %s50, %s52
      %p56 = scmp.eq.s32.totalorder %s16, 0
      %p57 = por %p55, %p56
      %p58 = scmp.ne.s32.totalorder %s50, %s52
      %p59 = scmp.eq.s32.totalorder %s21, 1
      %p60 = por %p58, %p59
      %p61 = scmp.ne.s32.totalorder %s52, %s53
      %p62 = scmp.eq.s32.totalorder %s21, 0
      %p63 = por %p61, %p62
      %p64 = scmp.ne.s32.totalorder %s52, %s53
      %p65 = scmp.eq.s32.totalorder %s22, 1
      %p66 = por %p64, %p65
      %p68 = scmp.ne.s32.totalorder %s53, %s67
      %p69 = scmp.eq.s32.totalorder %s22, 0
      %p70 = por %p68, %p69
      %s72 = sadd.s32 %s71, 1
      %p75 = scmp.eq.s32.totalorder %s16, 1
      %p76 = scmp.ne.s32.totalorder %s71, %s73
      %p77 = scmp.eq.s32.totalorder %s16, 0
      %p78 = por %p76, %p77
      %p79 = scmp.ne.s32.totalorder %s71, %s73
      %p80 = scmp.eq.s32.totalorder %s21, 1
      %p81 = por %p79, %p80
      %p82 = scmp.ne.s32.totalorder %s73, %s74
      %p83 = scmp.eq.s32.totalorder %s21, 0
      %p84 = por %p82, %p83
      %p85 = scmp.ne.s32.totalorder %s73, %s74
      %p86 = scmp.eq.s32.totalorder %s22, 1
      %p87 = por %p85, %p86
      %p89 = scmp.ne.s32.totalorder %s74, %s88
      %p90 = scmp.eq.s32.totalorder %s22, 0
      %p91 = por %p89, %p90
      %s93 = sadd.s32 %s92, 1
      %p96 = scmp.eq.s32.totalorder %s16, 1
      %p97 = scmp.ne.s32.totalorder %s92, %s94
      %p98 = scmp.eq.s32.totalorder %s16, 0
      %p99 = por %p97, %p98
      %p100 = scmp.ne.s32.totalorder %s92, %s94
      %p101 = scmp.eq.s32.totalorder %s21, 1
      %p102 = por %p100, %p101
      %p103 = scmp.ne.s32.totalorder %s94, %s95
      %p104 = scmp.eq.s32.totalorder %s21, 0
      %p105 = por %p103, %p104
      %p106 = scmp.ne.s32.totalorder %s94, %s95
      %p107 = scmp.eq.s32.totalorder %s22, 1
      %p108 = por %p106, %p107
      %p110 = scmp.ne.s32.totalorder %s95, %s109
      %p111 = scmp.eq.s32.totalorder %s22, 0
      %p112 = por %p110, %p111
      %s114 = sadd.s32 %s113, 1
      %p117 = scmp.eq.s32.totalorder %s16, 1
      %p118 = scmp.ne.s32.totalorder %s113, %s115
      %p119 = scmp.eq.s32.totalorder %s16, 0
      %p120 = por %p118, %p119
      %p121 = scmp.ne.s32.totalorder %s113, %s115
      %p122 = scmp.eq.s32.totalorder %s21, 1
      %p123 = por %p121, %p122
      %p124 = scmp.ne.s32.totalorder %s115, %s116
      %p125 = scmp.eq.s32.totalorder %s21, 0
      %p126 = por %p124, %p125
      %p127 = scmp.ne.s32.totalorder %s115, %s116
      %p128 = scmp.eq.s32.totalorder %s22, 1
      %p129 = por %p127, %p128
      %p131 = scmp.ne.s32.totalorder %s116, %s130
      %p132 = scmp.eq.s32.totalorder %s22, 0
      %p133 = por %p131, %p132
      %s135 = sadd.s32 %s134, 1
      %p138 = scmp.eq.s32.totalorder %s16, 1
      %p139 = scmp.ne.s32.totalorder %s134, %s136
      %p140 = scmp.eq.s32.totalorder %s16, 0
      %p141 = por %p139, %p140
      %p142 = scmp.ne.s32.totalorder %s134, %s136
      %p143 = scmp.eq.s32.totalorder %s21, 1
      %p144 = por %p142, %p143
      %p145 = scmp.ne.s32.totalorder %s136, %s137
      %p146 = scmp.eq.s32.totalorder %s21, 0
      %p147 = por %p145, %p146
      %p148 = scmp.ne.s32.totalorder %s136, %s137
      %p149 = scmp.eq.s32.totalorder %s22, 1
      %p150 = por %p148, %p149
      %p152 = scmp.ne.s32.totalorder %s137, %s151
      %p153 = scmp.eq.s32.totalorder %s22, 0
      %p154 = por %p152, %p153
      %s156 = sadd.s32 %s155, 1
      %p159 = scmp.eq.s32.totalorder %s16, 1
      %p160 = scmp.ne.s32.totalorder %s155, %s157
      %p161 = scmp.eq.s32.totalorder %s16, 0
      %p162 = por %p160, %p161
      %p163 = scmp.ne.s32.totalorder %s155, %s157
      %p164 = scmp.eq.s32.totalorder %s21, 1
      %p165 = por %p163, %p164
      %p166 = scmp.ne.s32.totalorder %s157, %s158
      %p167 = scmp.eq.s32.totalorder %s21, 0
      %p168 = por %p166, %p167
      %p169 = scmp.ne.s32.totalorder %s157, %s158
      %p170 = scmp.eq.s32.totalorder %s22, 1
      %p171 = por %p169, %p170
      %p173 = scmp.ne.s32.totalorder %s158, %s172
      %p174 = scmp.eq.s32.totalorder %s22, 0
      %p175 = por %p173, %p174
      %s176 = ssub.s32 %s16, %s23
      %p177 = scmp.eq.s32.totalorder %s176, 0
      %s179 = sadd.s32 %s178, 1
      %s180 = scalar_select %p177, %s178, %s179
      %p183 = pneg %p177
      %p184 = scmp.eq.s32.totalorder %s16, 1
      %p185 = por %p183, %p184
      %p186 = scmp.ne.s32.totalorder %s178, %s181
      %p187 = scmp.eq.s32.totalorder %s16, 0
      %p188 = por %p186, %p187
      %p189 = scmp.ne.s32.totalorder %s178, %s181
      %p190 = scmp.eq.s32.totalorder %s21, 1
      %p191 = por %p189, %p190
      %p192 = scmp.ne.s32.totalorder %s181, %s182
      %p193 = scmp.eq.s32.totalorder %s21, 0
      %p194 = por %p192, %p193
      %p195 = scmp.ne.s32.totalorder %s181, %s182
      %p196 = scmp.eq.s32.totalorder %s22, 1
      %p197 = por %p195, %p196
      %p199 = scmp.ne.s32.totalorder %s182, %s198
      %p200 = scmp.eq.s32.totalorder %s22, 0
      %p201 = por %p199, %p200
      %p202 = scmp.le.s32.totalorder 1, %s16
      %p203 = scmp.lt.s32.totalorder %s16, 3
      %p204 = pnand %p202, %p203
      %p205 = pneg %p204
      // Predicated region
      $region9: #{tpu_custom_call.1} parent=5 // pred_check
        _
      $region10: #{tpu_custom_call.1} parent=5 // pred_check_branch
        %207 = sbr.rel (%p204) target = $region12
      $region11: #{tpu_custom_call.1} parent=5 // pred_region
        %s208 = ssub.s32 %s16, 1
        // Predicated region
        $region13: #{tpu_custom_call.1} parent=11 // pred_check
          %p209 = pneg %p63
        $region14: #{tpu_custom_call.1} parent=11 // pred_check_branch
          %211 = sbr.rel (%p209) target = $region16
        $region15: #{tpu_custom_call.1} parent=11 // pred_region
          _
        $region16: #{tpu_custom_call.1} parent=11 // pred_fallthru
          _
        // Predicated region
        $region17: #{tpu_custom_call.1} parent=11 // pred_check
          %p212 = pneg %p84
        $region18: #{tpu_custom_call.1} parent=11 // pred_check_branch
          %214 = sbr.rel (%p212) target = $region20
        $region19: #{tpu_custom_call.1} parent=11 // pred_region
          _
        $region20: #{tpu_custom_call.1} parent=11 // pred_fallthru
          _
        // Predicated region
        $region21: #{tpu_custom_call.1} parent=11 // pred_check
          %p215 = pneg %p105
        $region22: #{tpu_custom_call.1} parent=11 // pred_check_branch
          %217 = sbr.rel (%p215) target = $region24
        $region23: #{tpu_custom_call.1} parent=11 // pred_region
          _
        $region24: #{tpu_custom_call.1} parent=11 // pred_fallthru
          _
        // Predicated region
        $region25: #{tpu_custom_call.1} parent=11 // pred_check
          %p218 = pneg %p126
        $region26: #{tpu_custom_call.1} parent=11 // pred_check_branch
          %220 = sbr.rel (%p218) target = $region28
        $region27: #{tpu_custom_call.1} parent=11 // pred_region
          _
        $region28: #{tpu_custom_call.1} parent=11 // pred_fallthru
          _
        // Predicated region
        $region29: #{tpu_custom_call.1} parent=11 // pred_check
          %p221 = pneg %p147
        $region30: #{tpu_custom_call.1} parent=11 // pred_check_branch
          %223 = sbr.rel (%p221) target = $region32
        $region31: #{tpu_custom_call.1} parent=11 // pred_region
          _
        $region32: #{tpu_custom_call.1} parent=11 // pred_fallthru
          _
        // Predicated region
        $region33: #{tpu_custom_call.1} parent=11 // pred_check
          %p224 = pneg %p168
        $region34: #{tpu_custom_call.1} parent=11 // pred_check_branch
          %226 = sbr.rel (%p224) target = $region36
        $region35: #{tpu_custom_call.1} parent=11 // pred_region
          _
        $region36: #{tpu_custom_call.1} parent=11 // pred_fallthru
          _
      $region12: #{tpu_custom_call.1} parent=5 // pred_fallthru
        _
      %p227 = scmp.lt.s32.totalorder %s16, 2
      // Predicated region
      $region37: #{tpu_custom_call.1} parent=5 // pred_check
        %p228 = pneg %p227
      $region38: #{tpu_custom_call.1} parent=5 // pred_check_branch
        %230 = sbr.rel (%p228) target = $region40
      $region39: #{tpu_custom_call.1} parent=5 // pred_region
        // Predicated region
        $region41: #{tpu_custom_call.1} parent=39 // pred_check
          %p231 = pneg %p36
        $region42: #{tpu_custom_call.1} parent=39 // pred_check_branch
          %233 = sbr.rel (%p231) target = $region44
        $region43: #{tpu_custom_call.1} parent=39 // pred_region
          %s234 = smul.u32 32, %s16
          %s235 = ssub.s32 38, %s234
          %p236 = scmp.lt.s32.totalorder %s235, 32
          %s237 = scalar_select %p236, %s235, 32
          %s238 = smul.u32 128, %s237
          %p239 = scmp.lt.s32.totalorder %s234, 37
          %s240 = scalar_select %p239, %s234, 37
          %s241 = smul.addr %s240, 8
          %s242 = scalar_lea.vmem %s0, %s241
          %s243 = smul.u32 32, %s16
          %s244 = ssub.s32 38, %s243
          %p245 = scmp.lt.s32.totalorder %s244, 32
          %s246 = scalar_select %p245, %s244, 32
          %s247 = smul.u32 128, %s246
        $region44: #{tpu_custom_call.1} parent=39 // pred_fallthru
          _
      $region40: #{tpu_custom_call.1} parent=5 // pred_fallthru
        _
      %p248 = scmp.le.s32.totalorder 1, %s16
      %p249 = scmp.lt.s32.totalorder %s16, 3
      %p250 = pnand %p248, %p249
      %p251 = pneg %p250
      // Predicated region
      $region45: #{tpu_custom_call.1} parent=5 // pred_check
        _
      $region46: #{tpu_custom_call.1} parent=5 // pred_check_branch
        %253 = sbr.rel (%p250) target = $region48
      $region47: #{tpu_custom_call.1} parent=5 // pred_region
        %s254 = ssub.s32 %s16, 1
        %s255 = smul.u32 32, %s21
        %s256 = ssub.s32 38, %s255
        %p257 = scmp.lt.s32.totalorder %s256, 32
        %s258 = scalar_select %p257, %s256, 32
        %s259 = smul.u32 128, %s258
        %p260 = scmp.lt.s32.totalorder %s255, 37
        %s261 = scalar_select %p260, %s255, 37
        %s262 = smul.addr %s261, 8
        %s263 = scalar_lea.vmem %s0, %s262
        %p264 = pneg %p42
        %p265 = pneg %p39
        %p266 = pneg %p63
        %p267 = pneg %p60
        %p268 = pneg %p84
        %p269 = pneg %p81
        %p270 = pneg %p105
        %p271 = pneg %p102
        %p272 = pneg %p126
        %p273 = pneg %p123
        %p274 = pneg %p147
        %p275 = pneg %p144
        %p276 = pneg %p168
        %p277 = pneg %p165
        %p278 = pneg %p194
        %p279 = pneg %p191
        %s280 = sand.u32 %s181, 1
        %s281 = scalar_lea.sflag [#allocation3], %s280
        %s282 = sand.u32 %s181, 1
        %s283 = smul.addr %s282, 2
        %s284 = scalar_lea.vmem [#allocation2], %s283
        %s285 = smul.u32 32, %s21
        %s286 = ssub.s32 38, %s285
        %p287 = scmp.lt.s32.totalorder %s286, 32
        %s288 = scalar_select %p287, %s286, 32
        %s289 = smul.u32 128, %s288
        %p290 = scmp.lt.s32.totalorder %s285, 37
        %s291 = scalar_select %p290, %s285, 37
        %s292 = smul.addr %s291, 8
        %s293 = scalar_lea.vmem %s0, %s292
        %s294 = smul.u32 32, %s21
        %s295 = ssub.s32 38, %s294
        %p296 = scmp.lt.s32.totalorder %s295, 32
        %s297 = scalar_select %p296, %s295, 32
        %s298 = smul.u32 128, %s297
        %s299 = smul.u32 2, %s21
        %v300 = vld [vmem:[%s293] sm:$0xff]
        %v301 = vld [vmem:[%s293 + $0x8] sm:$0xff]
        %v302 = vld [vmem:[%s293 + $0x10] sm:$0xff]
        %v303 = vld [vmem:[%s293 + $0x18] sm:$0xff]
        %v304 = vld [vmem:[%s293 + $0x20] sm:$0xff]
        %v305 = vld [vmem:[%s293 + $0x28] sm:$0xff]
        %v306 = vld [vmem:[%s293 + $0x30] sm:$0xff]
        %v307 = vld [vmem:[%s293 + $0x38] sm:$0xff]
        %v308 = vld [vmem:[%s293 + $0x40] sm:$0xff]
        %v309 = vld [vmem:[%s293 + $0x48] sm:$0xff]
        %v310 = vld [vmem:[%s293 + $0x50] sm:$0xff]
        %v311 = vld [vmem:[%s293 + $0x58] sm:$0xff]
        %v312 = vld [vmem:[%s293 + $0x60] sm:$0xff]
        %v313 = vld [vmem:[%s293 + $0x68] sm:$0xff]
        %v314 = vld [vmem:[%s293 + $0x70] sm:$0xff]
        %v315 = vld [vmem:[%s293 + $0x78] sm:$0xff]
        %v316 = vld [vmem:[%s293 + $0x80] sm:$0xff]
        %v317 = vld [vmem:[%s293 + $0x88] sm:$0xff]
        %v318 = vld [vmem:[%s293 + $0x90] sm:$0xff]
        %v319 = vld [vmem:[%s293 + $0x98] sm:$0xff]
        %v320 = vld [vmem:[%s293 + $0xa0] sm:$0xff]
        %v321 = vld [vmem:[%s293 + $0xa8] sm:$0xff]
        %v322 = vld [vmem:[%s293 + $0xb0] sm:$0xff]
        %v323 = vld [vmem:[%s293 + $0xb8] sm:$0xff]
        %v324 = vld [vmem:[%s293 + $0xc0] sm:$0xff]
        %v325 = vld [vmem:[%s293 + $0xc8] sm:$0xff]
        %v326 = vld [vmem:[%s293 + $0xd0] sm:$0xff]
        %v327 = vld [vmem:[%s293 + $0xd8] sm:$0xff]
        %v328 = vld [vmem:[%s293 + $0xe0] sm:$0xff]
        %v329 = vld [vmem:[%s293 + $0xe8] sm:$0xff]
        %v330 = vld [vmem:[%s293 + $0xf0] sm:$0xff]
        %v331 = vld [vmem:[%s293 + $0xf8] sm:$0xff]
        %v332 = vld [vmem:[%s1] sm:$0xff]
        %v333 = vld [vmem:[%s2] sm:$0xff]
        %335 = vset.pattern.permute.xlu0 0
        %336 = vperm.xlu0 %335, %v333
        %v337 = vpop.permute.xlu0 %336
        %vm339 = vcmask 523264
        %v341 = vsel %vm339, %v332, 0
        %v344 = vsel %vm339, %v300, 0
        %v347 = vsel %vm339, %v301, 0
        %v350 = vsel %vm339, %v302, 0
        %v353 = vsel %vm339, %v303, 0
        %v356 = vsel %vm339, %v304, 0
        %v359 = vsel %vm339, %v305, 0
        %v362 = vsel %vm339, %v306, 0
        %v365 = vsel %vm339, %v307, 0
        %v368 = vsel %vm339, %v308, 0
        %v371 = vsel %vm339, %v309, 0
        %v374 = vsel %vm339, %v310, 0
        %v377 = vsel %vm339, %v311, 0
        %v380 = vsel %vm339, %v312, 0
        %v383 = vsel %vm339, %v313, 0
        %v386 = vsel %vm339, %v314, 0
        %v389 = vsel %vm339, %v315, 0
        %v392 = vsel %vm339, %v316, 0
        %v395 = vsel %vm339, %v317, 0
        %v398 = vsel %vm339, %v318, 0
        %v401 = vsel %vm339, %v319, 0
        %v404 = vsel %vm339, %v320, 0
        %v407 = vsel %vm339, %v321, 0
        %v410 = vsel %vm339, %v322, 0
        %v413 = vsel %vm339, %v323, 0
        %v416 = vsel %vm339, %v324, 0
        %v419 = vsel %vm339, %v325, 0
        %v422 = vsel %vm339, %v326, 0
        %v425 = vsel %vm339, %v327, 0
        %v428 = vsel %vm339, %v328, 0
        %v431 = vsel %vm339, %v329, 0
        %v434 = vsel %vm339, %v330, 0
        %v437 = vsel %vm339, %v331, 0
        %439 = vmatprep.subr.mxu0 0.0
        %440 = vmatpush1.xpose.msra.mxu0 %v389
        %441 = vmatprep.subr.mxu0 0.0
        %442 = vmatpush1.xpose.msra.mxu0 %v386
        %443 = vmatprep.subr.mxu0 0.0
        %444 = vmatpush1.xpose.msra.mxu0 %v383
        %445 = vmatprep.subr.mxu0 0.0
        %446 = vmatpush1.xpose.msra.mxu0 %v380
        %447 = vmatprep.subr.mxu0 0.0
        %448 = vmatpush1.xpose.msra.mxu0 %v377
        %449 = vmatprep.subr.mxu0 0.0
        %450 = vmatpush1.xpose.msra.mxu0 %v374
        %451 = vmatprep.subr.mxu0 0.0
        %452 = vmatpush1.xpose.msra.mxu0 %v371
        %453 = vmatprep.subr.mxu0 0.0
        %454 = vmatpush1.xpose.msra.mxu0 %v368
        %455 = vmatprep.subr.mxu0 0.0
        %456 = vmatpush1.xpose.msra.mxu0 %v365
        %457 = vmatprep.subr.mxu0 0.0
        %458 = vmatpush1.xpose.msra.mxu0 %v362
        %459 = vmatprep.subr.mxu0 0.0
        %460 = vmatpush1.xpose.msra.mxu0 %v359
        %461 = vmatprep.subr.mxu0 0.0
        %462 = vmatpush1.xpose.msra.mxu0 %v356
        %463 = vmatprep.subr.mxu0 0.0
        %464 = vmatpush1.xpose.msra.mxu0 %v353
        %465 = vmatprep.subr.mxu0 0.0
        %466 = vmatpush1.xpose.msra.mxu0 %v350
        %467 = vmatprep.subr.mxu0 0.0
        %468 = vmatpush1.xpose.msra.mxu0 %v347
        %469 = vmatprep.subr.mxu0 0.0
        %470 = vmatpush1.xpose.msra.mxu0 %v344
        %471 = vmatprep.subr.mxu0 0.0
        %472 = vmatpush2.xpose.msra.mxu0 %v437
        %473 = vmatprep.subr.mxu0 0.0
        %474 = vmatpush2.xpose.msra.mxu0 %v434
        %475 = vmatprep.subr.mxu0 0.0
        %476 = vmatpush2.xpose.msra.mxu0 %v431
        %477 = vmatprep.subr.mxu0 0.0
        %478 = vmatpush2.xpose.msra.mxu0 %v428
        %479 = vmatprep.subr.mxu0 0.0
        %480 = vmatpush2.xpose.msra.mxu0 %v425
        %481 = vmatprep.subr.mxu0 0.0
        %482 = vmatpush2.xpose.msra.mxu0 %v422
        %483 = vmatprep.subr.mxu0 0.0
        %484 = vmatpush2.xpose.msra.mxu0 %v419
        %485 = vmatprep.subr.mxu0 0.0
        %486 = vmatpush2.xpose.msra.mxu0 %v416
        %487 = vmatprep.subr.mxu0 0.0
        %488 = vmatpush2.xpose.msra.mxu0 %v413
        %489 = vmatprep.subr.mxu0 0.0
        %490 = vmatpush2.xpose.msra.mxu0 %v410
        %491 = vmatprep.subr.mxu0 0.0
        %492 = vmatpush2.xpose.msra.mxu0 %v407
        %493 = vmatprep.subr.mxu0 0.0
        %494 = vmatpush2.xpose.msra.mxu0 %v404
        %495 = vmatprep.subr.mxu0 0.0
        %496 = vmatpush2.xpose.msra.mxu0 %v401
        %497 = vmatprep.subr.mxu0 0.0
        %498 = vmatpush2.xpose.msra.mxu0 %v398
        %499 = vmatprep.subr.mxu0 0.0
        %500 = vmatpush2.xpose.msra.mxu0 %v395
        %501 = vmatprep.subr.mxu0 0.0
        %502 = vmatpush2.xpose.msra.mxu0 %v392
        %503 = vmatprep.mubr.f32.mxu0 0.0
        %504 = vmatmul.mubr.f32.gmra.mxu0 %v341
        %v505 = vpop.f32.mrf.mxu0
        %v506 = vadd.f32 %v337, %v505
        %v507 = vpop.f32.mrf.mxu0
        %v508 = vadd.f32 %v337, %v507
        %509 = vdwg.mxu0
        %v510 = vmax.f32 %v506, 0.0
        %v511 = vmax.f32 %v508, 0.0
        %v512 = vld [vmem:[%s3] sm:$0xff]
        %v513 = vld [vmem:[%s4] sm:$0xff]
        %515 = vset.pattern.permute.xlu0 0
        %516 = vperm.xlu0 %515, %v513
        %v517 = vpop.permute.xlu0 %516
        %vm519 = vcmask 64512
        %v521 = vsel %vm519, %v512, 0
        %523 = vmatprep.subr.mxu0 0.0
        %524 = vmatpush1.msra.mxu0 0.0
        %525 = vmatprep.subr.mxu0 0.0
        %526 = vmatpush1.msra.mxu0 0.0
        %527 = vmatprep.subr.mxu0 0.0
        %528 = vmatpush1.msra.mxu0 0.0
        %529 = vmatprep.subr.mxu0 0.0
        %530 = vmatpush1.msra.mxu0 0.0
        %531 = vmatprep.subr.mxu0 0.0
        %532 = vmatpush1.msra.mxu0 0.0
        %533 = vmatprep.subr.mxu0 0.0
        %534 = vmatpush1.msra.mxu0 0.0
        %535 = vmatprep.subr.mxu0 0.0
        %536 = vmatpush1.msra.mxu0 0.0
        %537 = vmatprep.subr.mxu0 0.0
        %538 = vmatpush1.msra.mxu0 0.0
        %539 = vmatprep.subr.mxu0 0.0
        %540 = vmatpush1.msra.mxu0 0.0
        %541 = vmatprep.subr.mxu0 0.0
        %542 = vmatpush1.msra.mxu0 0.0
        %543 = vmatprep.subr.mxu0 0.0
        %544 = vmatpush1.msra.mxu0 0.0
        %545 = vmatprep.subr.mxu0 0.0
        %546 = vmatpush1.msra.mxu0 0.0
        %547 = vmatprep.subr.mxu0 0.0
        %548 = vmatpush1.msra.mxu0 0.0
        %549 = vmatprep.subr.mxu0 0.0
        %550 = vmatpush1.msra.mxu0 0.0
        %551 = vmatprep.subr.mxu0 0.0
        %552 = vmatpush1.msra.mxu0 0.0
        %553 = vmatprep.subr.mxu0 %v511
        %554 = vmatpush1.msra.mxu0 %v510
        %555 = vmatprep.subr.mxu0 0.0
        %556 = vmatpush2.msra.mxu0 0.0
        %557 = vmatprep.subr.mxu0 0.0
        %558 = vmatpush2.msra.mxu0 0.0
        %559 = vmatprep.subr.mxu0 0.0
        %560 = vmatpush2.msra.mxu0 0.0
        %561 = vmatprep.subr.mxu0 0.0
        %562 = vmatpush2.msra.mxu0 0.0
        %563 = vmatprep.subr.mxu0 0.0
        %564 = vmatpush2.msra.mxu0 0.0
        %565 = vmatprep.subr.mxu0 0.0
        %566 = vmatpush2.msra.mxu0 0.0
        %567 = vmatprep.subr.mxu0 0.0
        %568 = vmatpush2.msra.mxu0 0.0
        %569 = vmatprep.subr.mxu0 0.0
        %570 = vmatpush2.msra.mxu0 0.0
        %571 = vmatprep.subr.mxu0 0.0
        %572 = vmatpush2.msra.mxu0 0.0
        %573 = vmatprep.subr.mxu0 0.0
        %574 = vmatpush2.msra.mxu0 0.0
        %575 = vmatprep.subr.mxu0 0.0
        %576 = vmatpush2.msra.mxu0 0.0
        %577 = vmatprep.subr.mxu0 0.0
        %578 = vmatpush2.msra.mxu0 0.0
        %579 = vmatprep.subr.mxu0 0.0
        %580 = vmatpush2.msra.mxu0 0.0
        %581 = vmatprep.subr.mxu0 0.0
        %582 = vmatpush2.msra.mxu0 0.0
        %583 = vmatprep.subr.mxu0 0.0
        %584 = vmatpush2.msra.mxu0 0.0
        %585 = vmatprep.subr.mxu0 0.0
        %586 = vmatpush2.msra.mxu0 0.0
        %587 = vmatprep.mubr.f32.mxu0 0.0
        %588 = vmatmul.mubr.f32.gmra.mxu0 %v521
        %v589 = vpop.f32.mrf.mxu0
        %v590 = vadd.f32 %v517, %v589
        %v591 = vpop.f32.mrf.mxu0
        %v592 = vadd.f32 %v517, %v591
        %593 = vdwg.mxu0
        %v594 = vmax.f32 %v590, 0.0
        %v595 = vmax.f32 %v592, 0.0
        %v596 = vld [vmem:[%s5] sm:$0xff]
        %v597 = vld [vmem:[%s6] sm:$0xff]
        %599 = vset.pattern.permute.xlu0 0
        %600 = vperm.xlu0 %599, %v597
        %v601 = vpop.permute.xlu0 %600
        %v604 = vsel %vm519, %v596, 0
        %606 = vmatprep.subr.mxu0 0.0
        %607 = vmatpush1.msra.mxu0 0.0
        %608 = vmatprep.subr.mxu0 0.0
        %609 = vmatpush1.msra.mxu0 0.0
        %610 = vmatprep.subr.mxu0 0.0
        %611 = vmatpush1.msra.mxu0 0.0
        %612 = vmatprep.subr.mxu0 0.0
        %613 = vmatpush1.msra.mxu0 0.0
        %614 = vmatprep.subr.mxu0 0.0
        %615 = vmatpush1.msra.mxu0 0.0
        %616 = vmatprep.subr.mxu0 0.0
        %617 = vmatpush1.msra.mxu0 0.0
        %618 = vmatprep.subr.mxu0 0.0
        %619 = vmatpush1.msra.mxu0 0.0
        %620 = vmatprep.subr.mxu0 0.0
        %621 = vmatpush1.msra.mxu0 0.0
        %622 = vmatprep.subr.mxu0 0.0
        %623 = vmatpush1.msra.mxu0 0.0
        %624 = vmatprep.subr.mxu0 0.0
        %625 = vmatpush1.msra.mxu0 0.0
        %626 = vmatprep.subr.mxu0 0.0
        %627 = vmatpush1.msra.mxu0 0.0
        %628 = vmatprep.subr.mxu0 0.0
        %629 = vmatpush1.msra.mxu0 0.0
        %630 = vmatprep.subr.mxu0 0.0
        %631 = vmatpush1.msra.mxu0 0.0
        %632 = vmatprep.subr.mxu0 0.0
        %633 = vmatpush1.msra.mxu0 0.0
        %634 = vmatprep.subr.mxu0 0.0
        %635 = vmatpush1.msra.mxu0 0.0
        %636 = vmatprep.subr.mxu0 %v595
        %637 = vmatpush1.msra.mxu0 %v594
        %638 = vmatprep.subr.mxu0 0.0
        %639 = vmatpush2.msra.mxu0 0.0
        %640 = vmatprep.subr.mxu0 0.0
        %641 = vmatpush2.msra.mxu0 0.0
        %642 = vmatprep.subr.mxu0 0.0
        %643 = vmatpush2.msra.mxu0 0.0
        %644 = vmatprep.subr.mxu0 0.0
        %645 = vmatpush2.msra.mxu0 0.0
        %646 = vmatprep.subr.mxu0 0.0
        %647 = vmatpush2.msra.mxu0 0.0
        %648 = vmatprep.subr.mxu0 0.0
        %649 = vmatpush2.msra.mxu0 0.0
        %650 = vmatprep.subr.mxu0 0.0
        %651 = vmatpush2.msra.mxu0 0.0
        %652 = vmatprep.subr.mxu0 0.0
        %653 = vmatpush2.msra.mxu0 0.0
        %654 = vmatprep.subr.mxu0 0.0
        %655 = vmatpush2.msra.mxu0 0.0
        %656 = vmatprep.subr.mxu0 0.0
        %657 = vmatpush2.msra.mxu0 0.0
        %658 = vmatprep.subr.mxu0 0.0
        %659 = vmatpush2.msra.mxu0 0.0
        %660 = vmatprep.subr.mxu0 0.0
        %661 = vmatpush2.msra.mxu0 0.0
        %662 = vmatprep.subr.mxu0 0.0
        %663 = vmatpush2.msra.mxu0 0.0
        %664 = vmatprep.subr.mxu0 0.0
        %665 = vmatpush2.msra.mxu0 0.0
        %666 = vmatprep.subr.mxu0 0.0
        %667 = vmatpush2.msra.mxu0 0.0
        %668 = vmatprep.subr.mxu0 0.0
        %669 = vmatpush2.msra.mxu0 0.0
        %670 = vmatprep.mubr.f32.mxu0 0.0
        %671 = vmatmul.mubr.f32.gmra.mxu0 %v604
        %v672 = vpop.f32.mrf.mxu0
        %v673 = vadd.f32 %v601, %v672
        %v674 = vpop.f32.mrf.mxu0
        %v675 = vadd.f32 %v601, %v674
        %676 = vdwg.mxu0
        %v677 = vmax.f32 %v673, 0.0
        %v678 = vmax.f32 %v675, 0.0
        %v681 = vcombine.low %v677, %v678
        %v683 = vunpack.c.l.s4 1966171168
        %v684 = vunpack.c.0.s8 %v683
        %v685 = vlaneseq
        %v686 = vshrl.u32 %v685, 7
        %v687 = vsub.s32 %v684, %v686
        %v688 = vrot.slane %v681, %v687
        %v690 = vunpack.c.l.s4 1966171168
        %v691 = vunpack.c.0.s8 %v690
        %v692 = vlaneseq
        %v693 = vshrl.u32 %v692, 7
        %v694 = vsub.s32 %v691, %v693
        %v695 = vrot.slane %v688, %v694
        %v697 = vlaneseq
        %vm698 = vcmp.ge.s32.totalorder %v697, 0
        %vm699 = vcmp.lt.s32.totalorder %v697, 256
        %vm700 = vmand %vm698, %vm699
        %701 = vst.msk [vmem:[%s284] sm:$0x3] %vm700, %v695
        %s702 = sand.u32 %s181, 1
        %s703 = scalar_lea.sflag [#allocation3], %s702
        %s704 = sand.u32 %s181, 1
        %s705 = smul.addr %s704, 2
        %s706 = scalar_lea.vmem [#allocation2], %s705
        // Predicated region
        $region49: #{tpu_custom_call.1} parent=47 // pred_check
          %p707 = pneg %p191
        $region50: #{tpu_custom_call.1} parent=47 // pred_check_branch
          %709 = sbr.rel (%p707) target = $region52
        $region51: #{tpu_custom_call.1} parent=47 // pred_region
          %s710 = smul.u32 2, %s21
          %s712 = ssub.s32 32, 32
          %713 = vsyncadd %s703, %s712
          %s714 = smul.addr %s710, 16
          %s715 = scalar_lea.hbm %s7, %s714
          %s717 = sshll.u32 %s706, 4
          %s718 = int_to_ptr.vmem [resolvable:$true] %s717
          %720 = dma.vmem_to_hbm [thread:$0]  %s718, 32, %s715, %s703
        $region52: #{tpu_custom_call.1} parent=47 // pred_fallthru
          _
      $region48: #{tpu_custom_call.1} parent=5 // pred_fallthru
        _
      %p721 = scmp.le.s32.totalorder 2, %s16
      // Predicated region
      $region53: #{tpu_custom_call.1} parent=5 // pred_check
        %p722 = pneg %p721
      $region54: #{tpu_custom_call.1} parent=5 // pred_check_branch
        %724 = sbr.rel (%p722) target = $region56
      $region55: #{tpu_custom_call.1} parent=5 // pred_region
        %s725 = ssub.s32 %s16, 2
        // Predicated region
        $region57: #{tpu_custom_call.1} parent=55 // pred_check
          %p726 = pneg %p197
        $region58: #{tpu_custom_call.1} parent=55 // pred_check_branch
          %728 = sbr.rel (%p726) target = $region60
        $region59: #{tpu_custom_call.1} parent=55 // pred_region
          %s729 = sand.u32 %s182, 1
          %s730 = scalar_lea.sflag [#allocation3], %s729
          %s731 = sand.u32 %s182, 1
          %s732 = smul.addr %s731, 2
          %s733 = scalar_lea.vmem [#allocation2], %s732
          %734 = dma.done %s730, 32
        $region60: #{tpu_custom_call.1} parent=55 // pred_fallthru
          _
      $region56: #{tpu_custom_call.1} parent=5 // pred_fallthru
        _
    $region6: #{tpu_custom_call.1} parent=1 // loop_footer
      %s20 = sadd.s32 1, %s16
    $region7: #{tpu_custom_call.1} parent=1 // loop_footer_branch
      %15 = sbr.rel target = $region3
    $region8: #{tpu_custom_call.1} parent=1 // loop_exit
      _
    %735 = vsyncpa [#allocation3], 1
    %s736 = scalar_lea.sflag [#allocation3], 1
    %737 = vsyncpa %s736, 1

// kernel: tpu_custom_call.1
$region0: #{tpu_custom_call.1}
  #allocation0 [shape = 'u32[]', space=smem, size = 0x4, offset = 0x4, fixed_abs, tag = 'smem constant byte address 0x4 - core index']
  #allocation1 [shape = 'u32[144,128]{1,0:T(1,128)}', space=vmem, size = 0x12000, scoped, tag = 'internal scratch']
  #allocation2 [shape = 'f32[1,1]{1,0:T(1,128)S(1)}', space=vmem, size = 0x200, scoped, tag = 'scoped memory for tpu_custom_call.1']
  %s0 = inlined_call_operand.vmem [shape: f32[300,64], index: 0, kind: input, shape index: {}]
  %s1 = inlined_call_operand.vmem [shape: f32[64,8], index: 1, kind: input, shape index: {}]
  %s2 = inlined_call_operand.vmem [shape: f32[1,8], index: 2, kind: input, shape index: {}]
  %s3 = inlined_call_operand.vmem [shape: f32[8,4], index: 3, kind: input, shape index: {}]
  %s4 = inlined_call_operand.vmem [shape: f32[1,4], index: 4, kind: input, shape index: {}]
  %s5 = inlined_call_operand.vmem [shape: f32[4,1], index: 5, kind: input, shape index: {}]
  %s6 = inlined_call_operand.<no memory space> [shape: f32[1,1], index: 6, kind: input, shape index: {}]
  %s7 = inlined_call_operand.vmem [shape: f32[512,1], index: 7, kind: output, shape index: {}]
  %s8 = sld [smem:[#allocation0]]
  $region61: #{tpu_custom_call.1} parent=0
    _
  %s10 = ssub.s32 1, %s8
  %s11 = scalar_select 0, %s10, %s8
  %v12 = vstv %s6
  %13 = vst [vmem:[#allocation2] sm:$0x1] %v12
  loop: start=0, step=1, limit=4
  $region2: #{tpu_custom_call.1} parent=0 // loop_pre_header
    _
  $region3: #{tpu_custom_call.1} parent=0 // loop_header
    %s15 = sphi 0, %s19
    %p16 = scmp.ge.s32.totalorder %s15, 4
    %s25 = sphi 0, %s27
    %s28 = sphi 0, %s25
    %s29 = sphi 0, %s28
    %s45 = sphi 0, %s29
    %s49 = sphi 0, %s49
    %s51 = sphi 0, %s49
    %s52 = sphi 0, %s51
    %s66 = sphi 0, %s52
    %s70 = sphi 0, %s70
    %s72 = sphi 0, %s70
    %s73 = sphi 0, %s72
    %s87 = sphi 0, %s73
    %s91 = sphi 0, %s91
    %s93 = sphi 0, %s91
    %s94 = sphi 0, %s93
    %s108 = sphi 0, %s94
    %s112 = sphi 0, %s112
    %s114 = sphi 0, %s112
    %s115 = sphi 0, %s114
    %s129 = sphi 0, %s115
    %s133 = sphi 0, %s133
    %s135 = sphi 0, %s133
    %s136 = sphi 0, %s135
    %s150 = sphi 0, %s136
    %s154 = sphi 0, %s154
    %s156 = sphi 0, %s154
    %s157 = sphi 0, %s156
    %s171 = sphi 0, %s157
    %s177 = sphi 0, %s179
    %s180 = sphi 0, %s177
    %s181 = sphi 0, %s180
    %s197 = sphi 0, %s181
  $region4: #{tpu_custom_call.1} parent=0 // loop_header_branch
    %18 = sbr.rel (%p16) target = $region8
  $region5: #{tpu_custom_call.1} parent=0 // loop_body
    %s20 = ssub.s32 %s15, 1
    %s21 = ssub.s32 %s15, 2
    %s22 = sadd.s32 %s15, 1
    %s23 = ssub.s32 %s15, %s22
    %p24 = scmp.eq.s32.totalorder %s23, 0
    %s26 = sadd.s32 %s25, 1
    %s27 = scalar_select %p24, %s25, %s26
    %p30 = pneg %p24
    %p31 = scmp.eq.s32.totalorder %s15, 1
    %p32 = por %p30, %p31
    %p33 = scmp.ne.s32.totalorder %s25, %s28
    %p34 = scmp.eq.s32.totalorder %s15, 0
    %p35 = por %p33, %p34
    %p36 = scmp.ne.s32.totalorder %s25, %s28
    %p37 = scmp.eq.s32.totalorder %s20, 1
    %p38 = por %p36, %p37
    %p39 = scmp.ne.s32.totalorder %s28, %s29
    %p40 = scmp.eq.s32.totalorder %s20, 0
    %p41 = por %p39, %p40
    %p42 = scmp.ne.s32.totalorder %s28, %s29
    %p43 = scmp.eq.s32.totalorder %s21, 1
    %p44 = por %p42, %p43
    %p46 = scmp.ne.s32.totalorder %s29, %s45
    %p47 = scmp.eq.s32.totalorder %s21, 0
    %p48 = por %p46, %p47
    %s50 = sadd.s32 %s49, 1
    %p53 = scmp.eq.s32.totalorder %s15, 1
    %p54 = scmp.ne.s32.totalorder %s49, %s51
    %p55 = scmp.eq.s32.totalorder %s15, 0
    %p56 = por %p54, %p55
    %p57 = scmp.ne.s32.totalorder %s49, %s51
    %p58 = scmp.eq.s32.totalorder %s20, 1
    %p59 = por %p57, %p58
    %p60 = scmp.ne.s32.totalorder %s51, %s52
    %p61 = scmp.eq.s32.totalorder %s20, 0
    %p62 = por %p60, %p61
    %p63 = scmp.ne.s32.totalorder %s51, %s52
    %p64 = scmp.eq.s32.totalorder %s21, 1
    %p65 = por %p63, %p64
    %p67 = scmp.ne.s32.totalorder %s52, %s66
    %p68 = scmp.eq.s32.totalorder %s21, 0
    %p69 = por %p67, %p68
    %s71 = sadd.s32 %s70, 1
    %p74 = scmp.eq.s32.totalorder %s15, 1
    %p75 = scmp.ne.s32.totalorder %s70, %s72
    %p76 = scmp.eq.s32.totalorder %s15, 0
    %p77 = por %p75, %p76
    %p78 = scmp.ne.s32.totalorder %s70, %s72
    %p79 = scmp.eq.s32.totalorder %s20, 1
    %p80 = por %p78, %p79
    %p81 = scmp.ne.s32.totalorder %s72, %s73
    %p82 = scmp.eq.s32.totalorder %s20, 0
    %p83 = por %p81, %p82
    %p84 = scmp.ne.s32.totalorder %s72, %s73
    %p85 = scmp.eq.s32.totalorder %s21, 1
    %p86 = por %p84, %p85
    %p88 = scmp.ne.s32.totalorder %s73, %s87
    %p89 = scmp.eq.s32.totalorder %s21, 0
    %p90 = por %p88, %p89
    %s92 = sadd.s32 %s91, 1
    %p95 = scmp.eq.s32.totalorder %s15, 1
    %p96 = scmp.ne.s32.totalorder %s91, %s93
    %p97 = scmp.eq.s32.totalorder %s15, 0
    %p98 = por %p96, %p97
    %p99 = scmp.ne.s32.totalorder %s91, %s93
    %p100 = scmp.eq.s32.totalorder %s20, 1
    %p101 = por %p99, %p100
    %p102 = scmp.ne.s32.totalorder %s93, %s94
    %p103 = scmp.eq.s32.totalorder %s20, 0
    %p104 = por %p102, %p103
    %p105 = scmp.ne.s32.totalorder %s93, %s94
    %p106 = scmp.eq.s32.totalorder %s21, 1
    %p107 = por %p105, %p106
    %p109 = scmp.ne.s32.totalorder %s94, %s108
    %p110 = scmp.eq.s32.totalorder %s21, 0
    %p111 = por %p109, %p110
    %s113 = sadd.s32 %s112, 1
    %p116 = scmp.eq.s32.totalorder %s15, 1
    %p117 = scmp.ne.s32.totalorder %s112, %s114
    %p118 = scmp.eq.s32.totalorder %s15, 0
    %p119 = por %p117, %p118
    %p120 = scmp.ne.s32.totalorder %s112, %s114
    %p121 = scmp.eq.s32.totalorder %s20, 1
    %p122 = por %p120, %p121
    %p123 = scmp.ne.s32.totalorder %s114, %s115
    %p124 = scmp.eq.s32.totalorder %s20, 0
    %p125 = por %p123, %p124
    %p126 = scmp.ne.s32.totalorder %s114, %s115
    %p127 = scmp.eq.s32.totalorder %s21, 1
    %p128 = por %p126, %p127
    %p130 = scmp.ne.s32.totalorder %s115, %s129
    %p131 = scmp.eq.s32.totalorder %s21, 0
    %p132 = por %p130, %p131
    %s134 = sadd.s32 %s133, 1
    %p137 = scmp.eq.s32.totalorder %s15, 1
    %p138 = scmp.ne.s32.totalorder %s133, %s135
    %p139 = scmp.eq.s32.totalorder %s15, 0
    %p140 = por %p138, %p139
    %p141 = scmp.ne.s32.totalorder %s133, %s135
    %p142 = scmp.eq.s32.totalorder %s20, 1
    %p143 = por %p141, %p142
    %p144 = scmp.ne.s32.totalorder %s135, %s136
    %p145 = scmp.eq.s32.totalorder %s20, 0
    %p146 = por %p144, %p145
    %p147 = scmp.ne.s32.totalorder %s135, %s136
    %p148 = scmp.eq.s32.totalorder %s21, 1
    %p149 = por %p147, %p148
    %p151 = scmp.ne.s32.totalorder %s136, %s150
    %p152 = scmp.eq.s32.totalorder %s21, 0
    %p153 = por %p151, %p152
    %s155 = sadd.s32 %s154, 1
    %p158 = scmp.eq.s32.totalorder %s15, 1
    %p159 = scmp.ne.s32.totalorder %s154, %s156
    %p160 = scmp.eq.s32.totalorder %s15, 0
    %p161 = por %p159, %p160
    %p162 = scmp.ne.s32.totalorder %s154, %s156
    %p163 = scmp.eq.s32.totalorder %s20, 1
    %p164 = por %p162, %p163
    %p165 = scmp.ne.s32.totalorder %s156, %s157
    %p166 = scmp.eq.s32.totalorder %s20, 0
    %p167 = por %p165, %p166
    %p168 = scmp.ne.s32.totalorder %s156, %s157
    %p169 = scmp.eq.s32.totalorder %s21, 1
    %p170 = por %p168, %p169
    %p172 = scmp.ne.s32.totalorder %s157, %s171
    %p173 = scmp.eq.s32.totalorder %s21, 0
    %p174 = por %p172, %p173
    %s175 = ssub.s32 %s15, %s22
    %p176 = scmp.eq.s32.totalorder %s175, 0
    %s178 = sadd.s32 %s177, 1
    %s179 = scalar_select %p176, %s177, %s178
    %p182 = pneg %p176
    %p183 = scmp.eq.s32.totalorder %s15, 1
    %p184 = por %p182, %p183
    %p185 = scmp.ne.s32.totalorder %s177, %s180
    %p186 = scmp.eq.s32.totalorder %s15, 0
    %p187 = por %p185, %p186
    %p188 = scmp.ne.s32.totalorder %s177, %s180
    %p189 = scmp.eq.s32.totalorder %s20, 1
    %p190 = por %p188, %p189
    %p191 = scmp.ne.s32.totalorder %s180, %s181
    %p192 = scmp.eq.s32.totalorder %s20, 0
    %p193 = por %p191, %p192
    %p194 = scmp.ne.s32.totalorder %s180, %s181
    %p195 = scmp.eq.s32.totalorder %s21, 1
    %p196 = por %p194, %p195
    %p198 = scmp.ne.s32.totalorder %s181, %s197
    %p199 = scmp.eq.s32.totalorder %s21, 0
    %p200 = por %p198, %p199
    %p201 = scmp.le.s32.totalorder 1, %s15
    %p202 = scmp.lt.s32.totalorder %s15, 3
    %p203 = pnand %p201, %p202
    %p204 = pneg %p203
    // Predicated region
    $region9: #{tpu_custom_call.1} parent=5 // pred_check
      _
    $region10: #{tpu_custom_call.1} parent=5 // pred_check_branch
      %206 = sbr.rel (%p203) target = $region12
    $region11: #{tpu_custom_call.1} parent=5 // pred_region
      %s207 = ssub.s32 %s15, 1
      // Predicated region
      $region13: #{tpu_custom_call.1} parent=11 // pred_check
        %p208 = pneg %p62
      $region14: #{tpu_custom_call.1} parent=11 // pred_check_branch
        %210 = sbr.rel (%p208) target = $region16
      $region15: #{tpu_custom_call.1} parent=11 // pred_region
        _
      $region16: #{tpu_custom_call.1} parent=11 // pred_fallthru
        _
      // Predicated region
      $region17: #{tpu_custom_call.1} parent=11 // pred_check
        %p211 = pneg %p83
      $region18: #{tpu_custom_call.1} parent=11 // pred_check_branch
        %213 = sbr.rel (%p211) target = $region20
      $region19: #{tpu_custom_call.1} parent=11 // pred_region
        _
      $region20: #{tpu_custom_call.1} parent=11 // pred_fallthru
        _
      // Predicated region
      $region21: #{tpu_custom_call.1} parent=11 // pred_check
        %p214 = pneg %p104
      $region22: #{tpu_custom_call.1} parent=11 // pred_check_branch
        %216 = sbr.rel (%p214) target = $region24
      $region23: #{tpu_custom_call.1} parent=11 // pred_region
        _
      $region24: #{tpu_custom_call.1} parent=11 // pred_fallthru
        _
      // Predicated region
      $region25: #{tpu_custom_call.1} parent=11 // pred_check
        %p217 = pneg %p125
      $region26: #{tpu_custom_call.1} parent=11 // pred_check_branch
        %219 = sbr.rel (%p217) target = $region28
      $region27: #{tpu_custom_call.1} parent=11 // pred_region
        _
      $region28: #{tpu_custom_call.1} parent=11 // pred_fallthru
        _
      // Predicated region
      $region29: #{tpu_custom_call.1} parent=11 // pred_check
        %p220 = pneg %p146
      $region30: #{tpu_custom_call.1} parent=11 // pred_check_branch
        %222 = sbr.rel (%p220) target = $region32
      $region31: #{tpu_custom_call.1} parent=11 // pred_region
        _
      $region32: #{tpu_custom_call.1} parent=11 // pred_fallthru
        _
      // Predicated region
      $region33: #{tpu_custom_call.1} parent=11 // pred_check
        %p223 = pneg %p167
      $region34: #{tpu_custom_call.1} parent=11 // pred_check_branch
        %225 = sbr.rel (%p223) target = $region36
      $region35: #{tpu_custom_call.1} parent=11 // pred_region
        _
      $region36: #{tpu_custom_call.1} parent=11 // pred_fallthru
        _
    $region12: #{tpu_custom_call.1} parent=5 // pred_fallthru
      _
    %p226 = scmp.lt.s32.totalorder %s15, 2
    // Predicated region
    $region37: #{tpu_custom_call.1} parent=5 // pred_check
      %p227 = pneg %p226
    $region38: #{tpu_custom_call.1} parent=5 // pred_check_branch
      %229 = sbr.rel (%p227) target = $region40
    $region39: #{tpu_custom_call.1} parent=5 // pred_region
      // Predicated region
      $region41: #{tpu_custom_call.1} parent=39 // pred_check
        %p230 = pneg %p35
      $region42: #{tpu_custom_call.1} parent=39 // pred_check_branch
        %232 = sbr.rel (%p230) target = $region44
      $region43: #{tpu_custom_call.1} parent=39 // pred_region
        %s233 = smul.u32 32, %s15
        %s234 = ssub.s32 38, %s233
        %p235 = scmp.lt.s32.totalorder %s234, 32
        %s236 = scalar_select %p235, %s234, 32
        %s237 = smul.u32 128, %s236
        %p238 = scmp.lt.s32.totalorder %s233, 37
        %s239 = scalar_select %p238, %s233, 37
        %s240 = smul.addr %s239, 8
        %s241 = scalar_lea.vmem %s0, %s240
        %s242 = smul.u32 32, %s15
        %s243 = ssub.s32 38, %s242
        %p244 = scmp.lt.s32.totalorder %s243, 32
        %s245 = scalar_select %p244, %s243, 32
        %s246 = smul.u32 128, %s245
      $region44: #{tpu_custom_call.1} parent=39 // pred_fallthru
        _
    $region40: #{tpu_custom_call.1} parent=5 // pred_fallthru
      _
    %p247 = scmp.le.s32.totalorder 1, %s15
    %p248 = scmp.lt.s32.totalorder %s15, 3
    %p249 = pnand %p247, %p248
    %p250 = pneg %p249
    // Predicated region
    $region45: #{tpu_custom_call.1} parent=5 // pred_check
      _
    $region46: #{tpu_custom_call.1} parent=5 // pred_check_branch
      %252 = sbr.rel (%p249) target = $region48
    $region47: #{tpu_custom_call.1} parent=5 // pred_region
      %s253 = ssub.s32 %s15, 1
      %s254 = smul.u32 32, %s20
      %s255 = ssub.s32 38, %s254
      %p256 = scmp.lt.s32.totalorder %s255, 32
      %s257 = scalar_select %p256, %s255, 32
      %s258 = smul.u32 128, %s257
      %p259 = scmp.lt.s32.totalorder %s254, 37
      %s260 = scalar_select %p259, %s254, 37
      %s261 = smul.addr %s260, 8
      %s262 = scalar_lea.vmem %s0, %s261
      %p263 = pneg %p41
      %p264 = pneg %p38
      %p265 = pneg %p62
      %p266 = pneg %p59
      %p267 = pneg %p83
      %p268 = pneg %p80
      %p269 = pneg %p104
      %p270 = pneg %p101
      %p271 = pneg %p125
      %p272 = pneg %p122
      %p273 = pneg %p146
      %p274 = pneg %p143
      %p275 = pneg %p167
      %p276 = pneg %p164
      %p277 = pneg %p193
      %p278 = pneg %p190
      %s279 = smul.u32 32, %s20
      %p280 = scmp.lt.s32.totalorder %s279, 63
      %s281 = scalar_select %p280, %s279, 63
      %s282 = smul.addr %s281, 8
      %s283 = scalar_lea.vmem %s7, %s282
      %s284 = smul.u32 32, %s20
      %s285 = ssub.s32 38, %s284
      %p286 = scmp.lt.s32.totalorder %s285, 32
      %s287 = scalar_select %p286, %s285, 32
      %s288 = smul.u32 128, %s287
      %p289 = scmp.lt.s32.totalorder %s284, 37
      %s290 = scalar_select %p289, %s284, 37
      %s291 = smul.addr %s290, 8
      %s292 = scalar_lea.vmem %s0, %s291
      %s293 = smul.u32 32, %s20
      %s294 = ssub.s32 38, %s293
      %p295 = scmp.lt.s32.totalorder %s294, 32
      %s296 = scalar_select %p295, %s294, 32
      %s297 = smul.u32 128, %s296
      %s298 = smul.u32 32, %s20
      %p299 = scmp.lt.s32.totalorder %s298, 63
      %s300 = scalar_select %p299, %s298, 63
      %s301 = smul.addr %s300, 8
      %s302 = scalar_lea.vmem %s7, %s301
      %s303 = smul.u32 32, %s20
      %v304 = vld [vmem:[%s292] sm:$0xff]
      %v305 = vld [vmem:[%s292 + $0x8] sm:$0xff]
      %v306 = vld [vmem:[%s292 + $0x10] sm:$0xff]
      %v307 = vld [vmem:[%s292 + $0x18] sm:$0xff]
      %v308 = vld [vmem:[%s292 + $0x20] sm:$0xff]
      %v309 = vld [vmem:[%s292 + $0x28] sm:$0xff]
      %v310 = vld [vmem:[%s292 + $0x30] sm:$0xff]
      %v311 = vld [vmem:[%s292 + $0x38] sm:$0xff]
      %v312 = vld [vmem:[%s292 + $0x40] sm:$0xff]
      %v313 = vld [vmem:[%s292 + $0x48] sm:$0xff]
      %v314 = vld [vmem:[%s292 + $0x50] sm:$0xff]
      %v315 = vld [vmem:[%s292 + $0x58] sm:$0xff]
      %v316 = vld [vmem:[%s292 + $0x60] sm:$0xff]
      %v317 = vld [vmem:[%s292 + $0x68] sm:$0xff]
      %v318 = vld [vmem:[%s292 + $0x70] sm:$0xff]
      %v319 = vld [vmem:[%s292 + $0x78] sm:$0xff]
      %v320 = vld [vmem:[%s292 + $0x80] sm:$0xff]
      %v321 = vld [vmem:[%s292 + $0x88] sm:$0xff]
      %v322 = vld [vmem:[%s292 + $0x90] sm:$0xff]
      %v323 = vld [vmem:[%s292 + $0x98] sm:$0xff]
      %v324 = vld [vmem:[%s292 + $0xa0] sm:$0xff]
      %v325 = vld [vmem:[%s292 + $0xa8] sm:$0xff]
      %v326 = vld [vmem:[%s292 + $0xb0] sm:$0xff]
      %v327 = vld [vmem:[%s292 + $0xb8] sm:$0xff]
      %v328 = vld [vmem:[%s292 + $0xc0] sm:$0xff]
      %v329 = vld [vmem:[%s292 + $0xc8] sm:$0xff]
      %v330 = vld [vmem:[%s292 + $0xd0] sm:$0xff]
      %v331 = vld [vmem:[%s292 + $0xd8] sm:$0xff]
      %v332 = vld [vmem:[%s292 + $0xe0] sm:$0xff]
      %v333 = vld [vmem:[%s292 + $0xe8] sm:$0xff]
      %v334 = vld [vmem:[%s292 + $0xf0] sm:$0xff]
      %v335 = vld [vmem:[%s292 + $0xf8] sm:$0xff]
      %v336 = vld [vmem:[%s1] sm:$0xff]
      %v337 = vld [vmem:[%s1 + $0x8] sm:$0xff]
      %v338 = vld [vmem:[%s1 + $0x10] sm:$0xff]
      %v339 = vld [vmem:[%s1 + $0x18] sm:$0xff]
      %v340 = vld [vmem:[%s1 + $0x20] sm:$0xff]
      %v341 = vld [vmem:[%s1 + $0x28] sm:$0xff]
      %v342 = vld [vmem:[%s1 + $0x30] sm:$0xff]
      %v343 = vld [vmem:[%s1 + $0x38] sm:$0xff]
      %v344 = vld [vmem:[%s2] sm:$0x1]
      %v346 = vlaneseq
      %v347 = vshrl.u32 %v346, 7
      %v348 = vsub.s32 0, %v347
      %v349 = vrot.slane %v344, %v348
      %vm351 = vcmask 523264
      %v353 = vsel %vm351, %v304, 0
      %v356 = vsel %vm351, %v305, 0
      %v359 = vsel %vm351, %v306, 0
      %v362 = vsel %vm351, %v307, 0
      %v365 = vsel %vm351, %v308, 0
      %v368 = vsel %vm351, %v309, 0
      %v371 = vsel %vm351, %v310, 0
      %v374 = vsel %vm351, %v311, 0
      %v377 = vsel %vm351, %v312, 0
      %v380 = vsel %vm351, %v313, 0
      %v383 = vsel %vm351, %v314, 0
      %v386 = vsel %vm351, %v315, 0
      %v389 = vsel %vm351, %v316, 0
      %v392 = vsel %vm351, %v317, 0
      %v395 = vsel %vm351, %v318, 0
      %v398 = vsel %vm351, %v319, 0
      %v401 = vsel %vm351, %v320, 0
      %v404 = vsel %vm351, %v321, 0
      %v407 = vsel %vm351, %v322, 0
      %v410 = vsel %vm351, %v323, 0
      %v413 = vsel %vm351, %v324, 0
      %v416 = vsel %vm351, %v325, 0
      %v419 = vsel %vm351, %v326, 0
      %v422 = vsel %vm351, %v327, 0
      %v425 = vsel %vm351, %v328, 0
      %v428 = vsel %vm351, %v329, 0
      %v431 = vsel %vm351, %v330, 0
      %v434 = vsel %vm351, %v331, 0
      %v437 = vsel %vm351, %v332, 0
      %v440 = vsel %vm351, %v333, 0
      %v443 = vsel %vm351, %v334, 0
      %v446 = vsel %vm351, %v335, 0
      %448 = vmatprep.subr.mxu0 0.0
      %449 = vmatpush1.msra.mxu0 0.0
      %450 = vmatprep.subr.mxu0 0.0
      %451 = vmatpush1.msra.mxu0 0.0
      %452 = vmatprep.subr.mxu0 0.0
      %453 = vmatpush1.msra.mxu0 0.0
      %454 = vmatprep.subr.mxu0 0.0
      %455 = vmatpush1.msra.mxu0 0.0
      %456 = vmatprep.subr.mxu0 0.0
      %457 = vmatpush1.msra.mxu0 0.0
      %458 = vmatprep.subr.mxu0 0.0
      %459 = vmatpush1.msra.mxu0 0.0
      %460 = vmatprep.subr.mxu0 0.0
      %461 = vmatpush1.msra.mxu0 0.0
      %462 = vmatprep.subr.mxu0 0.0
      %463 = vmatpush1.msra.mxu0 0.0
      %464 = vmatprep.subr.mxu0 0.0
      %465 = vmatpush1.msra.mxu0 %v343
      %466 = vmatprep.subr.mxu0 0.0
      %467 = vmatpush1.msra.mxu0 %v342
      %468 = vmatprep.subr.mxu0 0.0
      %469 = vmatpush1.msra.mxu0 %v341
      %470 = vmatprep.subr.mxu0 0.0
      %471 = vmatpush1.msra.mxu0 %v340
      %472 = vmatprep.subr.mxu0 0.0
      %473 = vmatpush1.msra.mxu0 %v339
      %474 = vmatprep.subr.mxu0 0.0
      %475 = vmatpush1.msra.mxu0 %v338
      %476 = vmatprep.subr.mxu0 0.0
      %477 = vmatpush1.msra.mxu0 %v337
      %478 = vmatprep.subr.mxu0 0.0
      %479 = vmatpush1.msra.mxu0 %v336
      %480 = vmatprep.subr.mxu0 0.0
      %481 = vmatpush2.msra.mxu0 0.0
      %482 = vmatprep.subr.mxu0 0.0
      %483 = vmatpush2.msra.mxu0 0.0
      %484 = vmatprep.subr.mxu0 0.0
      %485 = vmatpush2.msra.mxu0 0.0
      %486 = vmatprep.subr.mxu0 0.0
      %487 = vmatpush2.msra.mxu0 0.0
      %488 = vmatprep.subr.mxu0 0.0
      %489 = vmatpush2.msra.mxu0 0.0
      %490 = vmatprep.subr.mxu0 0.0
      %491 = vmatpush2.msra.mxu0 0.0
      %492 = vmatprep.subr.mxu0 0.0
      %493 = vmatpush2.msra.mxu0 0.0
      %494 = vmatprep.subr.mxu0 0.0
      %495 = vmatpush2.msra.mxu0 0.0
      %496 = vmatprep.subr.mxu0 0.0
      %497 = vmatpush2.msra.mxu0 0.0
      %498 = vmatprep.subr.mxu0 0.0
      %499 = vmatpush2.msra.mxu0 0.0
      %500 = vmatprep.subr.mxu0 0.0
      %501 = vmatpush2.msra.mxu0 0.0
      %502 = vmatprep.subr.mxu0 0.0
      %503 = vmatpush2.msra.mxu0 0.0
      %504 = vmatprep.subr.mxu0 0.0
      %505 = vmatpush2.msra.mxu0 0.0
      %506 = vmatprep.subr.mxu0 0.0
      %507 = vmatpush2.msra.mxu0 0.0
      %508 = vmatprep.subr.mxu0 0.0
      %509 = vmatpush2.msra.mxu0 0.0
      %510 = vmatprep.subr.mxu0 0.0
      %511 = vmatpush2.msra.mxu0 0.0
      %512 = vmatprep.mubr.f32.mxu0 0.0
      %513 = vmatmul.mubr.f32.gmra.mxu0 %v353
      %v514 = vpop.f32.mrf.mxu0
      %v515 = vadd.f32 %v349, %v514
      %v516 = vpop.f32.mrf.mxu0
      %517 = vmatprep.mubr.f32.mxu0 0.0
      %518 = vmatmul.mubr.f32.gmra.mxu0 %v356
      %v519 = vpop.f32.mrf.mxu0
      %v520 = vadd.f32 %v349, %v519
      %v521 = vpop.f32.mrf.mxu0
      %522 = vmatprep.mubr.f32.mxu0 0.0
      %523 = vmatmul.mubr.f32.gmra.mxu0 %v359
      %v524 = vpop.f32.mrf.mxu0
      %v525 = vadd.f32 %v349, %v524
      %v526 = vpop.f32.mrf.mxu0
      %527 = vmatprep.mubr.f32.mxu0 0.0
      %528 = vmatmul.mubr.f32.gmra.mxu0 %v362
      %v529 = vpop.f32.mrf.mxu0
      %v530 = vadd.f32 %v349, %v529
      %v531 = vpop.f32.mrf.mxu0
      %532 = vmatprep.mubr.f32.mxu0 0.0
      %533 = vmatmul.mubr.f32.gmra.mxu0 %v365
      %v534 = vpop.f32.mrf.mxu0
      %v535 = vadd.f32 %v349, %v534
      %v536 = vpop.f32.mrf.mxu0
      %537 = vmatprep.mubr.f32.mxu0 0.0
      %538 = vmatmul.mubr.f32.gmra.mxu0 %v368
      %v539 = vpop.f32.mrf.mxu0
      %v540 = vadd.f32 %v349, %v539
      %v541 = vpop.f32.mrf.mxu0
      %542 = vmatprep.mubr.f32.mxu0 0.0
      %543 = vmatmul.mubr.f32.gmra.mxu0 %v371
      %v544 = vpop.f32.mrf.mxu0
      %v545 = vadd.f32 %v349, %v544
      %v546 = vpop.f32.mrf.mxu0
      %547 = vmatprep.mubr.f32.mxu0 0.0
      %548 = vmatmul.mubr.f32.gmra.mxu0 %v374
      %v549 = vpop.f32.mrf.mxu0
      %v550 = vadd.f32 %v349, %v549
      %v551 = vpop.f32.mrf.mxu0
      %552 = vmatprep.mubr.f32.mxu0 0.0
      %553 = vmatmul.mubr.f32.gmra.mxu0 %v377
      %v554 = vpop.f32.mrf.mxu0
      %v555 = vadd.f32 %v349, %v554
      %v556 = vpop.f32.mrf.mxu0
      %557 = vmatprep.mubr.f32.mxu0 0.0
      %558 = vmatmul.mubr.f32.gmra.mxu0 %v380
      %v559 = vpop.f32.mrf.mxu0
      %v560 = vadd.f32 %v349, %v559
      %v561 = vpop.f32.mrf.mxu0
      %562 = vmatprep.mubr.f32.mxu0 0.0
      %563 = vmatmul.mubr.f32.gmra.mxu0 %v383
      %v564 = vpop.f32.mrf.mxu0
      %v565 = vadd.f32 %v349, %v564
      %v566 = vpop.f32.mrf.mxu0
      %567 = vmatprep.mubr.f32.mxu0 0.0
      %568 = vmatmul.mubr.f32.gmra.mxu0 %v386
      %v569 = vpop.f32.mrf.mxu0
      %v570 = vadd.f32 %v349, %v569
      %v571 = vpop.f32.mrf.mxu0
      %572 = vmatprep.mubr.f32.mxu0 0.0
      %573 = vmatmul.mubr.f32.gmra.mxu0 %v389
      %v574 = vpop.f32.mrf.mxu0
      %v575 = vadd.f32 %v349, %v574
      %v576 = vpop.f32.mrf.mxu0
      %577 = vmatprep.mubr.f32.mxu0 0.0
      %578 = vmatmul.mubr.f32.gmra.mxu0 %v392
      %v579 = vpop.f32.mrf.mxu0
      %v580 = vadd.f32 %v349, %v579
      %v581 = vpop.f32.mrf.mxu0
      %582 = vmatprep.mubr.f32.mxu0 0.0
      %583 = vmatmul.mubr.f32.gmra.mxu0 %v395
      %v584 = vpop.f32.mrf.mxu0
      %v585 = vadd.f32 %v349, %v584
      %v586 = vpop.f32.mrf.mxu0
      %587 = vmatprep.mubr.f32.mxu0 0.0
      %588 = vmatmul.mubr.f32.gmra.mxu0 %v398
      %v589 = vpop.f32.mrf.mxu0
      %v590 = vadd.f32 %v349, %v589
      %v591 = vpop.f32.mrf.mxu0
      %592 = vmatprep.mubr.f32.mxu0 0.0
      %593 = vmatmul.mubr.f32.gmra.mxu0 %v401
      %v594 = vpop.f32.mrf.mxu0
      %v595 = vadd.f32 %v349, %v594
      %v596 = vpop.f32.mrf.mxu0
      %597 = vmatprep.mubr.f32.mxu0 0.0
      %598 = vmatmul.mubr.f32.gmra.mxu0 %v404
      %v599 = vpop.f32.mrf.mxu0
      %v600 = vadd.f32 %v349, %v599
      %v601 = vpop.f32.mrf.mxu0
      %602 = vmatprep.mubr.f32.mxu0 0.0
      %603 = vmatmul.mubr.f32.gmra.mxu0 %v407
      %v604 = vpop.f32.mrf.mxu0
      %v605 = vadd.f32 %v349, %v604
      %v606 = vpop.f32.mrf.mxu0
      %607 = vmatprep.mubr.f32.mxu0 0.0
      %608 = vmatmul.mubr.f32.gmra.mxu0 %v410
      %v609 = vpop.f32.mrf.mxu0
      %v610 = vadd.f32 %v349, %v609
      %v611 = vpop.f32.mrf.mxu0
      %612 = vmatprep.mubr.f32.mxu0 0.0
      %613 = vmatmul.mubr.f32.gmra.mxu0 %v413
      %v614 = vpop.f32.mrf.mxu0
      %v615 = vadd.f32 %v349, %v614
      %v616 = vpop.f32.mrf.mxu0
      %617 = vmatprep.mubr.f32.mxu0 0.0
      %618 = vmatmul.mubr.f32.gmra.mxu0 %v416
      %v619 = vpop.f32.mrf.mxu0
      %v620 = vadd.f32 %v349, %v619
      %v621 = vpop.f32.mrf.mxu0
      %622 = vmatprep.mubr.f32.mxu0 0.0
      %623 = vmatmul.mubr.f32.gmra.mxu0 %v419
      %v624 = vpop.f32.mrf.mxu0
      %v625 = vadd.f32 %v349, %v624
      %v626 = vpop.f32.mrf.mxu0
      %627 = vmatprep.mubr.f32.mxu0 0.0
      %628 = vmatmul.mubr.f32.gmra.mxu0 %v422
      %v629 = vpop.f32.mrf.mxu0
      %v630 = vadd.f32 %v349, %v629
      %v631 = vpop.f32.mrf.mxu0
      %632 = vmatprep.mubr.f32.mxu0 0.0
      %633 = vmatmul.mubr.f32.gmra.mxu0 %v425
      %v634 = vpop.f32.mrf.mxu0
      %v635 = vadd.f32 %v349, %v634
      %v636 = vpop.f32.mrf.mxu0
      %637 = vmatprep.mubr.f32.mxu0 0.0
      %638 = vmatmul.mubr.f32.gmra.mxu0 %v428
      %v639 = vpop.f32.mrf.mxu0
      %v640 = vadd.f32 %v349, %v639
      %v641 = vpop.f32.mrf.mxu0
      %642 = vmatprep.mubr.f32.mxu0 0.0
      %643 = vmatmul.mubr.f32.gmra.mxu0 %v431
      %v644 = vpop.f32.mrf.mxu0
      %v645 = vadd.f32 %v349, %v644
      %v646 = vpop.f32.mrf.mxu0
      %647 = vmatprep.mubr.f32.mxu0 0.0
      %648 = vmatmul.mubr.f32.gmra.mxu0 %v434
      %v649 = vpop.f32.mrf.mxu0
      %v650 = vadd.f32 %v349, %v649
      %v651 = vpop.f32.mrf.mxu0
      %652 = vmatprep.mubr.f32.mxu0 0.0
      %653 = vmatmul.mubr.f32.gmra.mxu0 %v437
      %v654 = vpop.f32.mrf.mxu0
      %v655 = vadd.f32 %v349, %v654
      %v656 = vpop.f32.mrf.mxu0
      %657 = vmatprep.mubr.f32.mxu0 0.0
      %658 = vmatmul.mubr.f32.gmra.mxu0 %v440
      %v659 = vpop.f32.mrf.mxu0
      %v660 = vadd.f32 %v349, %v659
      %v661 = vpop.f32.mrf.mxu0
      %662 = vmatprep.mubr.f32.mxu0 0.0
      %663 = vmatmul.mubr.f32.gmra.mxu0 %v443
      %v664 = vpop.f32.mrf.mxu0
      %v665 = vadd.f32 %v349, %v664
      %v666 = vpop.f32.mrf.mxu0
      %667 = vmatprep.mubr.f32.mxu0 0.0
      %668 = vmatmul.mubr.f32.gmra.mxu0 %v446
      %v669 = vpop.f32.mrf.mxu0
      %v670 = vadd.f32 %v349, %v669
      %v671 = vpop.f32.mrf.mxu0
      %672 = vdwg.mxu0
      %v673 = vmax.f32 %v515, 0.0
      %v674 = vmax.f32 %v520, 0.0
      %v675 = vmax.f32 %v525, 0.0
      %v676 = vmax.f32 %v530, 0.0
      %v677 = vmax.f32 %v535, 0.0
      %v678 = vmax.f32 %v540, 0.0
      %v679 = vmax.f32 %v545, 0.0
      %v680 = vmax.f32 %v550, 0.0
      %v681 = vmax.f32 %v555, 0.0
      %v682 = vmax.f32 %v560, 0.0
      %v683 = vmax.f32 %v565, 0.0
      %v684 = vmax.f32 %v570, 0.0
      %v685 = vmax.f32 %v575, 0.0
      %v686 = vmax.f32 %v580, 0.0
      %v687 = vmax.f32 %v585, 0.0
      %v688 = vmax.f32 %v590, 0.0
      %v689 = vmax.f32 %v595, 0.0
      %v690 = vmax.f32 %v600, 0.0
      %v691 = vmax.f32 %v605, 0.0
      %v692 = vmax.f32 %v610, 0.0
      %v693 = vmax.f32 %v615, 0.0
      %v694 = vmax.f32 %v620, 0.0
      %v695 = vmax.f32 %v625, 0.0
      %v696 = vmax.f32 %v630, 0.0
      %v697 = vmax.f32 %v635, 0.0
      %v698 = vmax.f32 %v640, 0.0
      %v699 = vmax.f32 %v645, 0.0
      %v700 = vmax.f32 %v650, 0.0
      %v701 = vmax.f32 %v655, 0.0
      %v702 = vmax.f32 %v660, 0.0
      %v703 = vmax.f32 %v665, 0.0
      %v704 = vmax.f32 %v670, 0.0
      %v705 = vld [vmem:[%s3] sm:$0xff]
      %v706 = vld [vmem:[%s4] sm:$0x1]
      %v708 = vlaneseq
      %v709 = vshrl.u32 %v708, 7
      %v710 = vsub.s32 0, %v709
      %v711 = vrot.slane %v706, %v710
      %vm713 = vcmask 64512
      %v715 = vsel %vm713, %v673, 0
      %v718 = vsel %vm713, %v674, 0
      %v721 = vsel %vm713, %v675, 0
      %v724 = vsel %vm713, %v676, 0
      %v727 = vsel %vm713, %v677, 0
      %v730 = vsel %vm713, %v678, 0
      %v733 = vsel %vm713, %v679, 0
      %v736 = vsel %vm713, %v680, 0
      %v739 = vsel %vm713, %v681, 0
      %v742 = vsel %vm713, %v682, 0
      %v745 = vsel %vm713, %v683, 0
      %v748 = vsel %vm713, %v684, 0
      %v751 = vsel %vm713, %v685, 0
      %v754 = vsel %vm713, %v686, 0
      %v757 = vsel %vm713, %v687, 0
      %v760 = vsel %vm713, %v688, 0
      %v763 = vsel %vm713, %v689, 0
      %v766 = vsel %vm713, %v690, 0
      %v769 = vsel %vm713, %v691, 0
      %v772 = vsel %vm713, %v692, 0
      %v775 = vsel %vm713, %v693, 0
      %v778 = vsel %vm713, %v694, 0
      %v781 = vsel %vm713, %v695, 0
      %v784 = vsel %vm713, %v696, 0
      %v787 = vsel %vm713, %v697, 0
      %v790 = vsel %vm713, %v698, 0
      %v793 = vsel %vm713, %v699, 0
      %v796 = vsel %vm713, %v700, 0
      %v799 = vsel %vm713, %v701, 0
      %v802 = vsel %vm713, %v702, 0
      %v805 = vsel %vm713, %v703, 0
      %v808 = vsel %vm713, %v704, 0
      %810 = vmatprep.subr.mxu0 0.0
      %811 = vmatpush1.msra.mxu0 0.0
      %812 = vmatprep.subr.mxu0 0.0
      %813 = vmatpush1.msra.mxu0 0.0
      %814 = vmatprep.subr.mxu0 0.0
      %815 = vmatpush1.msra.mxu0 0.0
      %816 = vmatprep.subr.mxu0 0.0
      %817 = vmatpush1.msra.mxu0 0.0
      %818 = vmatprep.subr.mxu0 0.0
      %819 = vmatpush1.msra.mxu0 0.0
      %820 = vmatprep.subr.mxu0 0.0
      %821 = vmatpush1.msra.mxu0 0.0
      %822 = vmatprep.subr.mxu0 0.0
      %823 = vmatpush1.msra.mxu0 0.0
      %824 = vmatprep.subr.mxu0 0.0
      %825 = vmatpush1.msra.mxu0 0.0
      %826 = vmatprep.subr.mxu0 0.0
      %827 = vmatpush1.msra.mxu0 0.0
      %828 = vmatprep.subr.mxu0 0.0
      %829 = vmatpush1.msra.mxu0 0.0
      %830 = vmatprep.subr.mxu0 0.0
      %831 = vmatpush1.msra.mxu0 0.0
      %832 = vmatprep.subr.mxu0 0.0
      %833 = vmatpush1.msra.mxu0 0.0
      %834 = vmatprep.subr.mxu0 0.0
      %835 = vmatpush1.msra.mxu0 0.0
      %836 = vmatprep.subr.mxu0 0.0
      %837 = vmatpush1.msra.mxu0 0.0
      %838 = vmatprep.subr.mxu0 0.0
      %839 = vmatpush1.msra.mxu0 0.0
      %840 = vmatprep.subr.mxu0 0.0
      %841 = vmatpush1.msra.mxu0 %v705
      %842 = vmatprep.subr.mxu0 0.0
      %843 = vmatpush2.msra.mxu0 0.0
      %844 = vmatprep.subr.mxu0 0.0
      %845 = vmatpush2.msra.mxu0 0.0
      %846 = vmatprep.subr.mxu0 0.0
      %847 = vmatpush2.msra.mxu0 0.0
      %848 = vmatprep.subr.mxu0 0.0
      %849 = vmatpush2.msra.mxu0 0.0
      %850 = vmatprep.subr.mxu0 0.0
      %851 = vmatpush2.msra.mxu0 0.0
      %852 = vmatprep.subr.mxu0 0.0
      %853 = vmatpush2.msra.mxu0 0.0
      %854 = vmatprep.subr.mxu0 0.0
      %855 = vmatpush2.msra.mxu0 0.0
      %856 = vmatprep.subr.mxu0 0.0
      %857 = vmatpush2.msra.mxu0 0.0
      %858 = vmatprep.subr.mxu0 0.0
      %859 = vmatpush2.msra.mxu0 0.0
      %860 = vmatprep.subr.mxu0 0.0
      %861 = vmatpush2.msra.mxu0 0.0
      %862 = vmatprep.subr.mxu0 0.0
      %863 = vmatpush2.msra.mxu0 0.0
      %864 = vmatprep.subr.mxu0 0.0
      %865 = vmatpush2.msra.mxu0 0.0
      %866 = vmatprep.subr.mxu0 0.0
      %867 = vmatpush2.msra.mxu0 0.0
      %868 = vmatprep.subr.mxu0 0.0
      %869 = vmatpush2.msra.mxu0 0.0
      %870 = vmatprep.subr.mxu0 0.0
      %871 = vmatpush2.msra.mxu0 0.0
      %872 = vmatprep.subr.mxu0 0.0
      %873 = vmatpush2.msra.mxu0 0.0
      %874 = vmatprep.mubr.f32.mxu0 0.0
      %875 = vmatmul.mubr.f32.gmra.mxu0 %v715
      %v876 = vpop.f32.mrf.mxu0
      %v877 = vadd.f32 %v711, %v876
      %v878 = vpop.f32.mrf.mxu0
      %879 = vmatprep.mubr.f32.mxu0 0.0
      %880 = vmatmul.mubr.f32.gmra.mxu0 %v718
      %v881 = vpop.f32.mrf.mxu0
      %v882 = vadd.f32 %v711, %v881
      %v883 = vpop.f32.mrf.mxu0
      %884 = vmatprep.mubr.f32.mxu0 0.0
      %885 = vmatmul.mubr.f32.gmra.mxu0 %v721
      %v886 = vpop.f32.mrf.mxu0
      %v887 = vadd.f32 %v711, %v886
      %v888 = vpop.f32.mrf.mxu0
      %889 = vmatprep.mubr.f32.mxu0 0.0
      %890 = vmatmul.mubr.f32.gmra.mxu0 %v724
      %v891 = vpop.f32.mrf.mxu0
      %v892 = vadd.f32 %v711, %v891
      %v893 = vpop.f32.mrf.mxu0
      %894 = vmatprep.mubr.f32.mxu0 0.0
      %895 = vmatmul.mubr.f32.gmra.mxu0 %v727
      %v896 = vpop.f32.mrf.mxu0
      %v897 = vadd.f32 %v711, %v896
      %v898 = vpop.f32.mrf.mxu0
      %899 = vmatprep.mubr.f32.mxu0 0.0
      %900 = vmatmul.mubr.f32.gmra.mxu0 %v730
      %v901 = vpop.f32.mrf.mxu0
      %v902 = vadd.f32 %v711, %v901
      %v903 = vpop.f32.mrf.mxu0
      %904 = vmatprep.mubr.f32.mxu0 0.0
      %905 = vmatmul.mubr.f32.gmra.mxu0 %v733
      %v906 = vpop.f32.mrf.mxu0
      %v907 = vadd.f32 %v711, %v906
      %v908 = vpop.f32.mrf.mxu0
      %909 = vmatprep.mubr.f32.mxu0 0.0
      %910 = vmatmul.mubr.f32.gmra.mxu0 %v736
      %v911 = vpop.f32.mrf.mxu0
      %v912 = vadd.f32 %v711, %v911
      %v913 = vpop.f32.mrf.mxu0
      %914 = vmatprep.mubr.f32.mxu0 0.0
      %915 = vmatmul.mubr.f32.gmra.mxu0 %v739
      %v916 = vpop.f32.mrf.mxu0
      %v917 = vadd.f32 %v711, %v916
      %v918 = vpop.f32.mrf.mxu0
      %919 = vmatprep.mubr.f32.mxu0 0.0
      %920 = vmatmul.mubr.f32.gmra.mxu0 %v742
      %v921 = vpop.f32.mrf.mxu0
      %v922 = vadd.f32 %v711, %v921
      %v923 = vpop.f32.mrf.mxu0
      %924 = vmatprep.mubr.f32.mxu0 0.0
      %925 = vmatmul.mubr.f32.gmra.mxu0 %v745
      %v926 = vpop.f32.mrf.mxu0
      %v927 = vadd.f32 %v711, %v926
      %v928 = vpop.f32.mrf.mxu0
      %929 = vmatprep.mubr.f32.mxu0 0.0
      %930 = vmatmul.mubr.f32.gmra.mxu0 %v748
      %v931 = vpop.f32.mrf.mxu0
      %v932 = vadd.f32 %v711, %v931
      %v933 = vpop.f32.mrf.mxu0
      %934 = vmatprep.mubr.f32.mxu0 0.0
      %935 = vmatmul.mubr.f32.gmra.mxu0 %v751
      %v936 = vpop.f32.mrf.mxu0
      %v937 = vadd.f32 %v711, %v936
      %v938 = vpop.f32.mrf.mxu0
      %939 = vmatprep.mubr.f32.mxu0 0.0
      %940 = vmatmul.mubr.f32.gmra.mxu0 %v754
      %v941 = vpop.f32.mrf.mxu0
      %v942 = vadd.f32 %v711, %v941
      %v943 = vpop.f32.mrf.mxu0
      %944 = vmatprep.mubr.f32.mxu0 0.0
      %945 = vmatmul.mubr.f32.gmra.mxu0 %v757
      %v946 = vpop.f32.mrf.mxu0
      %v947 = vadd.f32 %v711, %v946
      %v948 = vpop.f32.mrf.mxu0
      %949 = vmatprep.mubr.f32.mxu0 0.0
      %950 = vmatmul.mubr.f32.gmra.mxu0 %v760
      %v951 = vpop.f32.mrf.mxu0
      %v952 = vadd.f32 %v711, %v951
      %v953 = vpop.f32.mrf.mxu0
      %954 = vmatprep.mubr.f32.mxu0 0.0
      %955 = vmatmul.mubr.f32.gmra.mxu0 %v763
      %v956 = vpop.f32.mrf.mxu0
      %v957 = vadd.f32 %v711, %v956
      %v958 = vpop.f32.mrf.mxu0
      %959 = vmatprep.mubr.f32.mxu0 0.0
      %960 = vmatmul.mubr.f32.gmra.mxu0 %v766
      %v961 = vpop.f32.mrf.mxu0
      %v962 = vadd.f32 %v711, %v961
      %v963 = vpop.f32.mrf.mxu0
      %964 = vmatprep.mubr.f32.mxu0 0.0
      %965 = vmatmul.mubr.f32.gmra.mxu0 %v769
      %v966 = vpop.f32.mrf.mxu0
      %v967 = vadd.f32 %v711, %v966
      %v968 = vpop.f32.mrf.mxu0
      %969 = vmatprep.mubr.f32.mxu0 0.0
      %970 = vmatmul.mubr.f32.gmra.mxu0 %v772
      %v971 = vpop.f32.mrf.mxu0
      %v972 = vadd.f32 %v711, %v971
      %v973 = vpop.f32.mrf.mxu0
      %974 = vmatprep.mubr.f32.mxu0 0.0
      %975 = vmatmul.mubr.f32.gmra.mxu0 %v775
      %v976 = vpop.f32.mrf.mxu0
      %v977 = vadd.f32 %v711, %v976
      %v978 = vpop.f32.mrf.mxu0
      %979 = vmatprep.mubr.f32.mxu0 0.0
      %980 = vmatmul.mubr.f32.gmra.mxu0 %v778
      %v981 = vpop.f32.mrf.mxu0
      %v982 = vadd.f32 %v711, %v981
      %v983 = vpop.f32.mrf.mxu0
      %984 = vmatprep.mubr.f32.mxu0 0.0
      %985 = vmatmul.mubr.f32.gmra.mxu0 %v781
      %v986 = vpop.f32.mrf.mxu0
      %v987 = vadd.f32 %v711, %v986
      %v988 = vpop.f32.mrf.mxu0
      %989 = vmatprep.mubr.f32.mxu0 0.0
      %990 = vmatmul.mubr.f32.gmra.mxu0 %v784
      %v991 = vpop.f32.mrf.mxu0
      %v992 = vadd.f32 %v711, %v991
      %v993 = vpop.f32.mrf.mxu0
      %994 = vmatprep.mubr.f32.mxu0 0.0
      %995 = vmatmul.mubr.f32.gmra.mxu0 %v787
      %v996 = vpop.f32.mrf.mxu0
      %v997 = vadd.f32 %v711, %v996
      %v998 = vpop.f32.mrf.mxu0
      %999 = vmatprep.mubr.f32.mxu0 0.0
      %1000 = vmatmul.mubr.f32.gmra.mxu0 %v790
      %v1001 = vpop.f32.mrf.mxu0
      %v1002 = vadd.f32 %v711, %v1001
      %v1003 = vpop.f32.mrf.mxu0
      %1004 = vmatprep.mubr.f32.mxu0 0.0
      %1005 = vmatmul.mubr.f32.gmra.mxu0 %v793
      %v1006 = vpop.f32.mrf.mxu0
      %v1007 = vadd.f32 %v711, %v1006
      %v1008 = vpop.f32.mrf.mxu0
      %1009 = vmatprep.mubr.f32.mxu0 0.0
      %1010 = vmatmul.mubr.f32.gmra.mxu0 %v796
      %v1011 = vpop.f32.mrf.mxu0
      %v1012 = vadd.f32 %v711, %v1011
      %v1013 = vpop.f32.mrf.mxu0
      %1014 = vmatprep.mubr.f32.mxu0 0.0
      %1015 = vmatmul.mubr.f32.gmra.mxu0 %v799
      %v1016 = vpop.f32.mrf.mxu0
      %v1017 = vadd.f32 %v711, %v1016
      %v1018 = vpop.f32.mrf.mxu0
      %1019 = vmatprep.mubr.f32.mxu0 0.0
      %1020 = vmatmul.mubr.f32.gmra.mxu0 %v802
      %v1021 = vpop.f32.mrf.mxu0
      %v1022 = vadd.f32 %v711, %v1021
      %v1023 = vpop.f32.mrf.mxu0
      %1024 = vmatprep.mubr.f32.mxu0 0.0
      %1025 = vmatmul.mubr.f32.gmra.mxu0 %v805
      %v1026 = vpop.f32.mrf.mxu0
      %v1027 = vadd.f32 %v711, %v1026
      %v1028 = vpop.f32.mrf.mxu0
      %1029 = vmatprep.mubr.f32.mxu0 0.0
      %1030 = vmatmul.mubr.f32.gmra.mxu0 %v808
      %v1031 = vpop.f32.mrf.mxu0
      %v1032 = vadd.f32 %v711, %v1031
      %v1033 = vpop.f32.mrf.mxu0
      %1034 = vdwg.mxu0
      %v1035 = vmax.f32 %v877, 0.0
      %v1036 = vmax.f32 %v882, 0.0
      %v1037 = vmax.f32 %v887, 0.0
      %v1038 = vmax.f32 %v892, 0.0
      %v1039 = vmax.f32 %v897, 0.0
      %v1040 = vmax.f32 %v902, 0.0
      %v1041 = vmax.f32 %v907, 0.0
      %v1042 = vmax.f32 %v912, 0.0
      %v1043 = vmax.f32 %v917, 0.0
      %v1044 = vmax.f32 %v922, 0.0
      %v1045 = vmax.f32 %v927, 0.0
      %v1046 = vmax.f32 %v932, 0.0
      %v1047 = vmax.f32 %v937, 0.0
      %v1048 = vmax.f32 %v942, 0.0
      %v1049 = vmax.f32 %v947, 0.0
      %v1050 = vmax.f32 %v952, 0.0
      %v1051 = vmax.f32 %v957, 0.0
      %v1052 = vmax.f32 %v962, 0.0
      %v1053 = vmax.f32 %v967, 0.0
      %v1054 = vmax.f32 %v972, 0.0
      %v1055 = vmax.f32 %v977, 0.0
      %v1056 = vmax.f32 %v982, 0.0
      %v1057 = vmax.f32 %v987, 0.0
      %v1058 = vmax.f32 %v992, 0.0
      %v1059 = vmax.f32 %v997, 0.0
      %v1060 = vmax.f32 %v1002, 0.0
      %v1061 = vmax.f32 %v1007, 0.0
      %v1062 = vmax.f32 %v1012, 0.0
      %v1063 = vmax.f32 %v1017, 0.0
      %v1064 = vmax.f32 %v1022, 0.0
      %v1065 = vmax.f32 %v1027, 0.0
      %v1066 = vmax.f32 %v1032, 0.0
      %v1067 = vld [vmem:[%s5] sm:$0xf]
      %v1068 = vld [vmem:[#allocation2] sm:$0x1]
      %v1070 = vlaneseq
      %v1071 = vshrl.u32 %v1070, 7
      %v1072 = vsub.s32 0, %v1071
      %v1073 = vrot.slane %v1068, %v1072
      %vm1075 = vcmask 31744
      %v1077 = vsel %vm1075, %v1035, 0
      %v1080 = vsel %vm1075, %v1036, 0
      %v1083 = vsel %vm1075, %v1037, 0
      %v1086 = vsel %vm1075, %v1038, 0
      %v1089 = vsel %vm1075, %v1039, 0
      %v1092 = vsel %vm1075, %v1040, 0
      %v1095 = vsel %vm1075, %v1041, 0
      %v1098 = vsel %vm1075, %v1042, 0
      %v1101 = vsel %vm1075, %v1043, 0
      %v1104 = vsel %vm1075, %v1044, 0
      %v1107 = vsel %vm1075, %v1045, 0
      %v1110 = vsel %vm1075, %v1046, 0
      %v1113 = vsel %vm1075, %v1047, 0
      %v1116 = vsel %vm1075, %v1048, 0
      %v1119 = vsel %vm1075, %v1049, 0
      %v1122 = vsel %vm1075, %v1050, 0
      %v1125 = vsel %vm1075, %v1051, 0
      %v1128 = vsel %vm1075, %v1052, 0
      %v1131 = vsel %vm1075, %v1053, 0
      %v1134 = vsel %vm1075, %v1054, 0
      %v1137 = vsel %vm1075, %v1055, 0
      %v1140 = vsel %vm1075, %v1056, 0
      %v1143 = vsel %vm1075, %v1057, 0
      %v1146 = vsel %vm1075, %v1058, 0
      %v1149 = vsel %vm1075, %v1059, 0
      %v1152 = vsel %vm1075, %v1060, 0
      %v1155 = vsel %vm1075, %v1061, 0
      %v1158 = vsel %vm1075, %v1062, 0
      %v1161 = vsel %vm1075, %v1063, 0
      %v1164 = vsel %vm1075, %v1064, 0
      %v1167 = vsel %vm1075, %v1065, 0
      %v1170 = vsel %vm1075, %v1066, 0
      %vm1172 = vcmask 1043456
      %v1174 = vsel %vm1172, %v1067, 0
      %1176 = vmatprep.subr.mxu0 0.0
      %1177 = vmatpush1.msra.mxu0 0.0
      %1178 = vmatprep.subr.mxu0 0.0
      %1179 = vmatpush1.msra.mxu0 0.0
      %1180 = vmatprep.subr.mxu0 0.0
      %1181 = vmatpush1.msra.mxu0 0.0
      %1182 = vmatprep.subr.mxu0 0.0
      %1183 = vmatpush1.msra.mxu0 0.0
      %1184 = vmatprep.subr.mxu0 0.0
      %1185 = vmatpush1.msra.mxu0 0.0
      %1186 = vmatprep.subr.mxu0 0.0
      %1187 = vmatpush1.msra.mxu0 0.0
      %1188 = vmatprep.subr.mxu0 0.0
      %1189 = vmatpush1.msra.mxu0 0.0
      %1190 = vmatprep.subr.mxu0 0.0
      %1191 = vmatpush1.msra.mxu0 0.0
      %1192 = vmatprep.subr.mxu0 0.0
      %1193 = vmatpush1.msra.mxu0 0.0
      %1194 = vmatprep.subr.mxu0 0.0
      %1195 = vmatpush1.msra.mxu0 0.0
      %1196 = vmatprep.subr.mxu0 0.0
      %1197 = vmatpush1.msra.mxu0 0.0
      %1198 = vmatprep.subr.mxu0 0.0
      %1199 = vmatpush1.msra.mxu0 0.0
      %1200 = vmatprep.subr.mxu0 0.0
      %1201 = vmatpush1.msra.mxu0 0.0
      %1202 = vmatprep.subr.mxu0 0.0
      %1203 = vmatpush1.msra.mxu0 0.0
      %1204 = vmatprep.subr.mxu0 0.0
      %1205 = vmatpush1.msra.mxu0 0.0
      %1206 = vmatprep.subr.mxu0 0.0
      %1207 = vmatpush1.msra.mxu0 %v1174
      %1208 = vmatprep.subr.mxu0 0.0
      %1209 = vmatpush2.msra.mxu0 0.0
      %1210 = vmatprep.subr.mxu0 0.0
      %1211 = vmatpush2.msra.mxu0 0.0
      %1212 = vmatprep.subr.mxu0 0.0
      %1213 = vmatpush2.msra.mxu0 0.0
      %1214 = vmatprep.subr.mxu0 0.0
      %1215 = vmatpush2.msra.mxu0 0.0
      %1216 = vmatprep.subr.mxu0 0.0
      %1217 = vmatpush2.msra.mxu0 0.0
      %1218 = vmatprep.subr.mxu0 0.0
      %1219 = vmatpush2.msra.mxu0 0.0
      %1220 = vmatprep.subr.mxu0 0.0
      %1221 = vmatpush2.msra.mxu0 0.0
      %1222 = vmatprep.subr.mxu0 0.0
      %1223 = vmatpush2.msra.mxu0 0.0
      %1224 = vmatprep.subr.mxu0 0.0
      %1225 = vmatpush2.msra.mxu0 0.0
      %1226 = vmatprep.subr.mxu0 0.0
      %1227 = vmatpush2.msra.mxu0 0.0
      %1228 = vmatprep.subr.mxu0 0.0
      %1229 = vmatpush2.msra.mxu0 0.0
      %1230 = vmatprep.subr.mxu0 0.0
      %1231 = vmatpush2.msra.mxu0 0.0
      %1232 = vmatprep.subr.mxu0 0.0
      %1233 = vmatpush2.msra.mxu0 0.0
      %1234 = vmatprep.subr.mxu0 0.0
      %1235 = vmatpush2.msra.mxu0 0.0
      %1236 = vmatprep.subr.mxu0 0.0
      %1237 = vmatpush2.msra.mxu0 0.0
      %1238 = vmatprep.subr.mxu0 0.0
      %1239 = vmatpush2.msra.mxu0 0.0
      %1240 = vmatprep.mubr.f32.mxu0 0.0
      %1241 = vmatmul.mubr.f32.gmra.mxu0 %v1077
      %v1242 = vpop.f32.mrf.mxu0
      %v1243 = vadd.f32 %v1073, %v1242
      %v1244 = vpop.f32.mrf.mxu0
      %1245 = vmatprep.mubr.f32.mxu0 0.0
      %1246 = vmatmul.mubr.f32.gmra.mxu0 %v1080
      %v1247 = vpop.f32.mrf.mxu0
      %v1248 = vadd.f32 %v1073, %v1247
      %v1249 = vpop.f32.mrf.mxu0
      %1250 = vmatprep.mubr.f32.mxu0 0.0
      %1251 = vmatmul.mubr.f32.gmra.mxu0 %v1083
      %v1252 = vpop.f32.mrf.mxu0
      %v1253 = vadd.f32 %v1073, %v1252
      %v1254 = vpop.f32.mrf.mxu0
      %1255 = vmatprep.mubr.f32.mxu0 0.0
      %1256 = vmatmul.mubr.f32.gmra.mxu0 %v1086
      %v1257 = vpop.f32.mrf.mxu0
      %v1258 = vadd.f32 %v1073, %v1257
      %v1259 = vpop.f32.mrf.mxu0
      %1260 = vmatprep.mubr.f32.mxu0 0.0
      %1261 = vmatmul.mubr.f32.gmra.mxu0 %v1089
      %v1262 = vpop.f32.mrf.mxu0
      %v1263 = vadd.f32 %v1073, %v1262
      %v1264 = vpop.f32.mrf.mxu0
      %1265 = vmatprep.mubr.f32.mxu0 0.0
      %1266 = vmatmul.mubr.f32.gmra.mxu0 %v1092
      %v1267 = vpop.f32.mrf.mxu0
      %v1268 = vadd.f32 %v1073, %v1267
      %v1269 = vpop.f32.mrf.mxu0
      %1270 = vmatprep.mubr.f32.mxu0 0.0
      %1271 = vmatmul.mubr.f32.gmra.mxu0 %v1095
      %v1272 = vpop.f32.mrf.mxu0
      %v1273 = vadd.f32 %v1073, %v1272
      %v1274 = vpop.f32.mrf.mxu0
      %1275 = vmatprep.mubr.f32.mxu0 0.0
      %1276 = vmatmul.mubr.f32.gmra.mxu0 %v1098
      %v1277 = vpop.f32.mrf.mxu0
      %v1278 = vadd.f32 %v1073, %v1277
      %v1279 = vpop.f32.mrf.mxu0
      %1280 = vmatprep.mubr.f32.mxu0 0.0
      %1281 = vmatmul.mubr.f32.gmra.mxu0 %v1101
      %v1282 = vpop.f32.mrf.mxu0
      %v1283 = vadd.f32 %v1073, %v1282
      %v1284 = vpop.f32.mrf.mxu0
      %1285 = vmatprep.mubr.f32.mxu0 0.0
      %1286 = vmatmul.mubr.f32.gmra.mxu0 %v1104
      %v1287 = vpop.f32.mrf.mxu0
      %v1288 = vadd.f32 %v1073, %v1287
      %v1289 = vpop.f32.mrf.mxu0
      %1290 = vmatprep.mubr.f32.mxu0 0.0
      %1291 = vmatmul.mubr.f32.gmra.mxu0 %v1107
      %v1292 = vpop.f32.mrf.mxu0
      %v1293 = vadd.f32 %v1073, %v1292
      %v1294 = vpop.f32.mrf.mxu0
      %1295 = vmatprep.mubr.f32.mxu0 0.0
      %1296 = vmatmul.mubr.f32.gmra.mxu0 %v1110
      %v1297 = vpop.f32.mrf.mxu0
      %v1298 = vadd.f32 %v1073, %v1297
      %v1299 = vpop.f32.mrf.mxu0
      %1300 = vmatprep.mubr.f32.mxu0 0.0
      %1301 = vmatmul.mubr.f32.gmra.mxu0 %v1113
      %v1302 = vpop.f32.mrf.mxu0
      %v1303 = vadd.f32 %v1073, %v1302
      %v1304 = vpop.f32.mrf.mxu0
      %1305 = vmatprep.mubr.f32.mxu0 0.0
      %1306 = vmatmul.mubr.f32.gmra.mxu0 %v1116
      %v1307 = vpop.f32.mrf.mxu0
      %v1308 = vadd.f32 %v1073, %v1307
      %v1309 = vpop.f32.mrf.mxu0
      %1310 = vmatprep.mubr.f32.mxu0 0.0
      %1311 = vmatmul.mubr.f32.gmra.mxu0 %v1119
      %v1312 = vpop.f32.mrf.mxu0
      %v1313 = vadd.f32 %v1073, %v1312
      %v1314 = vpop.f32.mrf.mxu0
      %1315 = vmatprep.mubr.f32.mxu0 0.0
      %1316 = vmatmul.mubr.f32.gmra.mxu0 %v1122
      %v1317 = vpop.f32.mrf.mxu0
      %v1318 = vadd.f32 %v1073, %v1317
      %v1319 = vpop.f32.mrf.mxu0
      %1320 = vmatprep.mubr.f32.mxu0 0.0
      %1321 = vmatmul.mubr.f32.gmra.mxu0 %v1125
      %v1322 = vpop.f32.mrf.mxu0
      %v1323 = vadd.f32 %v1073, %v1322
      %v1324 = vpop.f32.mrf.mxu0
      %1325 = vmatprep.mubr.f32.mxu0 0.0
      %1326 = vmatmul.mubr.f32.gmra.mxu0 %v1128
      %v1327 = vpop.f32.mrf.mxu0
      %v1328 = vadd.f32 %v1073, %v1327
      %v1329 = vpop.f32.mrf.mxu0
      %1330 = vmatprep.mubr.f32.mxu0 0.0
      %1331 = vmatmul.mubr.f32.gmra.mxu0 %v1131
      %v1332 = vpop.f32.mrf.mxu0
      %v1333 = vadd.f32 %v1073, %v1332
      %v1334 = vpop.f32.mrf.mxu0
      %1335 = vmatprep.mubr.f32.mxu0 0.0
      %1336 = vmatmul.mubr.f32.gmra.mxu0 %v1134
      %v1337 = vpop.f32.mrf.mxu0
      %v1338 = vadd.f32 %v1073, %v1337
      %v1339 = vpop.f32.mrf.mxu0
      %1340 = vmatprep.mubr.f32.mxu0 0.0
      %1341 = vmatmul.mubr.f32.gmra.mxu0 %v1137
      %v1342 = vpop.f32.mrf.mxu0
      %v1343 = vadd.f32 %v1073, %v1342
      %v1344 = vpop.f32.mrf.mxu0
      %1345 = vmatprep.mubr.f32.mxu0 0.0
      %1346 = vmatmul.mubr.f32.gmra.mxu0 %v1140
      %v1347 = vpop.f32.mrf.mxu0
      %v1348 = vadd.f32 %v1073, %v1347
      %v1349 = vpop.f32.mrf.mxu0
      %1350 = vmatprep.mubr.f32.mxu0 0.0
      %1351 = vmatmul.mubr.f32.gmra.mxu0 %v1143
      %v1352 = vpop.f32.mrf.mxu0
      %v1353 = vadd.f32 %v1073, %v1352
      %v1354 = vpop.f32.mrf.mxu0
      %1355 = vmatprep.mubr.f32.mxu0 0.0
      %1356 = vmatmul.mubr.f32.gmra.mxu0 %v1146
      %v1357 = vpop.f32.mrf.mxu0
      %v1358 = vadd.f32 %v1073, %v1357
      %v1359 = vpop.f32.mrf.mxu0
      %1360 = vmatprep.mubr.f32.mxu0 0.0
      %1361 = vmatmul.mubr.f32.gmra.mxu0 %v1149
      %v1362 = vpop.f32.mrf.mxu0
      %v1363 = vadd.f32 %v1073, %v1362
      %v1364 = vpop.f32.mrf.mxu0
      %1365 = vmatprep.mubr.f32.mxu0 0.0
      %1366 = vmatmul.mubr.f32.gmra.mxu0 %v1152
      %v1367 = vpop.f32.mrf.mxu0
      %v1368 = vadd.f32 %v1073, %v1367
      %v1369 = vpop.f32.mrf.mxu0
      %1370 = vmatprep.mubr.f32.mxu0 0.0
      %1371 = vmatmul.mubr.f32.gmra.mxu0 %v1155
      %v1372 = vpop.f32.mrf.mxu0
      %v1373 = vadd.f32 %v1073, %v1372
      %v1374 = vpop.f32.mrf.mxu0
      %1375 = vmatprep.mubr.f32.mxu0 0.0
      %1376 = vmatmul.mubr.f32.gmra.mxu0 %v1158
      %v1377 = vpop.f32.mrf.mxu0
      %v1378 = vadd.f32 %v1073, %v1377
      %v1379 = vpop.f32.mrf.mxu0
      %1380 = vmatprep.mubr.f32.mxu0 0.0
      %1381 = vmatmul.mubr.f32.gmra.mxu0 %v1161
      %v1382 = vpop.f32.mrf.mxu0
      %v1383 = vadd.f32 %v1073, %v1382
      %v1384 = vpop.f32.mrf.mxu0
      %1385 = vmatprep.mubr.f32.mxu0 0.0
      %1386 = vmatmul.mubr.f32.gmra.mxu0 %v1164
      %v1387 = vpop.f32.mrf.mxu0
      %v1388 = vadd.f32 %v1073, %v1387
      %v1389 = vpop.f32.mrf.mxu0
      %1390 = vmatprep.mubr.f32.mxu0 0.0
      %1391 = vmatmul.mubr.f32.gmra.mxu0 %v1167
      %v1392 = vpop.f32.mrf.mxu0
      %v1393 = vadd.f32 %v1073, %v1392
      %v1394 = vpop.f32.mrf.mxu0
      %1395 = vmatprep.mubr.f32.mxu0 0.0
      %1396 = vmatmul.mubr.f32.gmra.mxu0 %v1170
      %v1397 = vpop.f32.mrf.mxu0
      %v1398 = vadd.f32 %v1073, %v1397
      %v1399 = vpop.f32.mrf.mxu0
      %1400 = vdwg.mxu0
      %v1401 = vmax.f32 %v1243, 0.0
      %v1402 = vmax.f32 %v1248, 0.0
      %v1403 = vmax.f32 %v1253, 0.0
      %v1404 = vmax.f32 %v1258, 0.0
      %v1405 = vmax.f32 %v1263, 0.0
      %v1406 = vmax.f32 %v1268, 0.0
      %v1407 = vmax.f32 %v1273, 0.0
      %v1408 = vmax.f32 %v1278, 0.0
      %v1409 = vmax.f32 %v1283, 0.0
      %v1410 = vmax.f32 %v1288, 0.0
      %v1411 = vmax.f32 %v1293, 0.0
      %v1412 = vmax.f32 %v1298, 0.0
      %v1413 = vmax.f32 %v1303, 0.0
      %v1414 = vmax.f32 %v1308, 0.0
      %v1415 = vmax.f32 %v1313, 0.0
      %v1416 = vmax.f32 %v1318, 0.0
      %v1417 = vmax.f32 %v1323, 0.0
      %v1418 = vmax.f32 %v1328, 0.0
      %v1419 = vmax.f32 %v1333, 0.0
      %v1420 = vmax.f32 %v1338, 0.0
      %v1421 = vmax.f32 %v1343, 0.0
      %v1422 = vmax.f32 %v1348, 0.0
      %v1423 = vmax.f32 %v1353, 0.0
      %v1424 = vmax.f32 %v1358, 0.0
      %v1425 = vmax.f32 %v1363, 0.0
      %v1426 = vmax.f32 %v1368, 0.0
      %v1427 = vmax.f32 %v1373, 0.0
      %v1428 = vmax.f32 %v1378, 0.0
      %v1429 = vmax.f32 %v1383, 0.0
      %v1430 = vmax.f32 %v1388, 0.0
      %v1431 = vmax.f32 %v1393, 0.0
      %v1432 = vmax.f32 %v1398, 0.0
      %vm1433 = vcmask 7168
      %1434 = vst.msk [vmem:[%s302] sm:$0xff] %vm1433, %v1401
      %1435 = vst.msk [vmem:[%s302 + $0x8] sm:$0xff] %vm1433, %v1402
      %1436 = vst.msk [vmem:[%s302 + $0x10] sm:$0xff] %vm1433, %v1403
      %1437 = vst.msk [vmem:[%s302 + $0x18] sm:$0xff] %vm1433, %v1404
      %1438 = vst.msk [vmem:[%s302 + $0x20] sm:$0xff] %vm1433, %v1405
      %1439 = vst.msk [vmem:[%s302 + $0x28] sm:$0xff] %vm1433, %v1406
      %1440 = vst.msk [vmem:[%s302 + $0x30] sm:$0xff] %vm1433, %v1407
      %1441 = vst.msk [vmem:[%s302 + $0x38] sm:$0xff] %vm1433, %v1408
      %1442 = vst.msk [vmem:[%s302 + $0x40] sm:$0xff] %vm1433, %v1409
      %1443 = vst.msk [vmem:[%s302 + $0x48] sm:$0xff] %vm1433, %v1410
      %1444 = vst.msk [vmem:[%s302 + $0x50] sm:$0xff] %vm1433, %v1411
      %1445 = vst.msk [vmem:[%s302 + $0x58] sm:$0xff] %vm1433, %v1412
      %1446 = vst.msk [vmem:[%s302 + $0x60] sm:$0xff] %vm1433, %v1413
      %1447 = vst.msk [vmem:[%s302 + $0x68] sm:$0xff] %vm1433, %v1414
      %1448 = vst.msk [vmem:[%s302 + $0x70] sm:$0xff] %vm1433, %v1415
      %1449 = vst.msk [vmem:[%s302 + $0x78] sm:$0xff] %vm1433, %v1416
      %1450 = vst.msk [vmem:[%s302 + $0x80] sm:$0xff] %vm1433, %v1417
      %1451 = vst.msk [vmem:[%s302 + $0x88] sm:$0xff] %vm1433, %v1418
      %1452 = vst.msk [vmem:[%s302 + $0x90] sm:$0xff] %vm1433, %v1419
      %1453 = vst.msk [vmem:[%s302 + $0x98] sm:$0xff] %vm1433, %v1420
      %1454 = vst.msk [vmem:[%s302 + $0xa0] sm:$0xff] %vm1433, %v1421
      %1455 = vst.msk [vmem:[%s302 + $0xa8] sm:$0xff] %vm1433, %v1422
      %1456 = vst.msk [vmem:[%s302 + $0xb0] sm:$0xff] %vm1433, %v1423
      %1457 = vst.msk [vmem:[%s302 + $0xb8] sm:$0xff] %vm1433, %v1424
      %1458 = vst.msk [vmem:[%s302 + $0xc0] sm:$0xff] %vm1433, %v1425
      %1459 = vst.msk [vmem:[%s302 + $0xc8] sm:$0xff] %vm1433, %v1426
      %1460 = vst.msk [vmem:[%s302 + $0xd0] sm:$0xff] %vm1433, %v1427
      %1461 = vst.msk [vmem:[%s302 + $0xd8] sm:$0xff] %vm1433, %v1428
      %1462 = vst.msk [vmem:[%s302 + $0xe0] sm:$0xff] %vm1433, %v1429
      %1463 = vst.msk [vmem:[%s302 + $0xe8] sm:$0xff] %vm1433, %v1430
      %1464 = vst.msk [vmem:[%s302 + $0xf0] sm:$0xff] %vm1433, %v1431
      %1465 = vst.msk [vmem:[%s302 + $0xf8] sm:$0xff] %vm1433, %v1432
      %s1466 = smul.u32 32, %s20
      %p1467 = scmp.lt.s32.totalorder %s1466, 63
      %s1468 = scalar_select %p1467, %s1466, 63
      %s1469 = smul.addr %s1468, 8
      %s1470 = scalar_lea.vmem %s7, %s1469
      // Predicated region
      $region49: #{tpu_custom_call.1} parent=47 // pred_check
        %p1471 = pneg %p190
      $region50: #{tpu_custom_call.1} parent=47 // pred_check_branch
        %1473 = sbr.rel (%p1471) target = $region52
      $region51: #{tpu_custom_call.1} parent=47 // pred_region
        %s1474 = smul.u32 32, %s20
      $region52: #{tpu_custom_call.1} parent=47 // pred_fallthru
        _
    $region48: #{tpu_custom_call.1} parent=5 // pred_fallthru
      _
    %p1475 = scmp.le.s32.totalorder 2, %s15
    // Predicated region
    $region53: #{tpu_custom_call.1} parent=5 // pred_check
      %p1476 = pneg %p1475
    $region54: #{tpu_custom_call.1} parent=5 // pred_check_branch
      %1478 = sbr.rel (%p1476) target = $region56
    $region55: #{tpu_custom_call.1} parent=5 // pred_region
      %s1479 = ssub.s32 %s15, 2
      // Predicated region
      $region57: #{tpu_custom_call.1} parent=55 // pred_check
        %p1480 = pneg %p196
      $region58: #{tpu_custom_call.1} parent=55 // pred_check_branch
        %1482 = sbr.rel (%p1480) target = $region60
      $region59: #{tpu_custom_call.1} parent=55 // pred_region
        %s1483 = smul.u32 32, %s21
        %p1484 = scmp.lt.s32.totalorder %s1483, 63
        %s1485 = scalar_select %p1484, %s1483, 63
        %s1486 = smul.addr %s1485, 8
        %s1487 = scalar_lea.vmem %s7, %s1486
      $region60: #{tpu_custom_call.1} parent=55 // pred_fallthru
        _
    $region56: #{tpu_custom_call.1} parent=5 // pred_fallthru
      _
  $region6: #{tpu_custom_call.1} parent=0 // loop_footer
    %s19 = sadd.s32 1, %s15
  $region7: #{tpu_custom_call.1} parent=0 // loop_footer_branch
    %14 = sbr.rel target = $region3
  $region8: #{tpu_custom_call.1} parent=0 // loop_exit
    _

</llo_original>
